<compile_context>
chip_gen: v6e
topology: v6e:2x2x1
jax: 0.10.0
libtpu: 0.0.40
codegen_flags: <defaults>
</compile_context>

<pallas_src>
import functools
import math

import jax
import jax.numpy as jnp
from jax import lax
from jax.experimental import pallas as pl
from jax.experimental.pallas import tpu as pltpu

# Small, module-consistent shapes.
VOCAB = 64          # vocab_size
HIDDEN = 32         # hidden_size
LAYERS = 2          # num_hidden_layers
HEADS = 4           # num_attention_heads
MAX_LEN = 16        # max_position_embeddings
SEQ = 8             # runtime sequence length (<= MAX_LEN)
BATCH = 2
INTER = 4 * HIDDEN  # BERT intermediate_size default = 4 * hidden = 128
LN_EPS = 1e-12      # BertConfig layer_norm_eps default
WIDE = 128          # lane-dense width for padded QKV / FFN bias / logits


def _layer_norm(x, g, b, eps=LN_EPS):
    mu = jnp.mean(x, axis=-1, keepdims=True)
    var = jnp.mean((x - mu) ** 2, axis=-1, keepdims=True)
    return (x - mu) * lax.rsqrt(var + eps) * g + b


def _gelu(x):
    # exact (erf-based) GELU, matching HF BERT's hidden_act="gelu"
    return 0.5 * x * (1.0 + lax.erf(x * 0.7071067811865476))


def _row(ref, i):
    # Static row i of a packed (N, W) parameter array -> (1, W) value.
    return ref[pl.ds(i, 1), :]


def bert4rec_kernel(emb_ref, mask_ref, rep_ref, hmask_ref, sel_ref,
                    wqkv_ref, wo_ref, wi_ref, wo2_ref, wf_ref,
                    vech_ref, vecw_ref, out_ref, *, num_heads):
    BS, H = emb_ref.shape            # B*S flattened rows
    L = wqkv_ref.shape[0]
    nh = num_heads
    hd = H // nh
    scale = 1.0 / math.sqrt(hd)

    # Loop-invariant loads (hoisted once).
    mask_big = mask_ref[...]         # (nh*BS, nh*BS) f32 additive score mask
    rep = rep_ref[...]               # (nh*BS, BS)    bf16 0/1 row replication
    hmask = hmask_ref[...]           # (nh*BS, H)     f32 per-head lane mask
    g_emb = _row(vech_ref, 0)        # embedding LayerNorm gamma  (1, H)
    b_emb = _row(vech_ref, 1)        # embedding LayerNorm beta   (1, H)

    # Embedding LayerNorm over all B*S rows at once (dropout = identity, eval).
    x = _layer_norm(emb_ref[...], g_emb, b_emb)                     # (BS, H) f32

    for l in range(L):                                              # static unroll
        base = 2 + 6 * l
        bqkv = _row(vecw_ref, l)          # (1, 128) fused q|k|v bias (padded)
        bi   = _row(vecw_ref, L + l)      # (1, I=128) intermediate bias
        bo   = _row(vech_ref, base + 0)   # attn output-dense bias
        ln1g = _row(vech_ref, base + 1)
        ln1b = _row(vech_ref, base + 2)
        bo2  = _row(vech_ref, base + 3)   # ffn output-dense bias
        ln2g = _row(vech_ref, base + 4)
        ln2b = _row(vech_ref, base + 5)

        wqkv_l = wqkv_ref[l]              # (H, 128) bf16, cols 0:3H = Wq|Wk|Wv
        wo_l   = wo_ref[l]                # (H, H)   bf16
        wi_l   = wi_ref[l]                # (H, I)   bf16
        wo2_l  = wo2_ref[l]               # (I, H)   bf16

        # Fused QKV projection for ALL batch rows: one lane-dense matmul.
        qkv = jnp.dot(x.astype(jnp.bfloat16), wqkv_l,
                      preferred_element_type=jnp.float32) + bqkv    # (BS, 128)

        # Replicate projected rows once per head via a 0/1 matmul; rows of
        # qkv_rep are ordered (head, batch, seq).
        qkv_rep = jnp.dot(rep, qkv.astype(jnp.bfloat16),
                          preferred_element_type=jnp.float32)       # (nh*BS, 128)
        q = qkv_rep[:, 0:H] * scale               # fold 1/sqrt(hd) into q
        k = qkv_rep[:, H:2 * H] * hmask           # keep only own head's lanes
        v = qkv_rep[:, 2 * H:3 * H] * hmask       # ctx lands in own head's lanes

        # ONE score matmul for all (batch, head) pairs.  k is head-lane-masked,
        # so the 32-wide contraction reduces to the per-head 8-dim dot; the
        # additive mask kills cross-(batch,head) pairs and padded keys.
        s = lax.dot_general(q.astype(jnp.bfloat16), k.astype(jnp.bfloat16),
                            (((1,), (1,)), ((), ())),
                            preferred_element_type=jnp.float32)     # (nh*BS, nh*BS)
        s = s + mask_big
        s = s - jnp.max(s, axis=-1, keepdims=True)
        p = jnp.exp(s)
        p = p * pl.reciprocal(jnp.sum(p, axis=-1, keepdims=True), approx=True)

        # ONE ctx matmul; row-block h has non-zeros only in lane block h.
        ctx = jnp.dot(p.astype(jnp.bfloat16), v.astype(jnp.bfloat16),
                      preferred_element_type=jnp.float32)           # (nh*BS, H)

        # Merge heads: head blocks occupy disjoint lanes (others exactly 0),
        # so a plain sum of the aligned row blocks rebuilds (BS, H).
        merged = ctx[0:BS, :]
        for h in range(1, nh):
            merged = merged + ctx[h * BS:(h + 1) * BS, :]

        attn = jnp.dot(merged.astype(jnp.bfloat16), wo_l,
                       preferred_element_type=jnp.float32) + bo     # (BS, H)

        x = _layer_norm(attn + x, ln1g, ln1b)

        # Feed-forward (GELU) over all batch rows; f32 element-wise math.
        ff = _gelu(jnp.dot(x.astype(jnp.bfloat16), wi_l,
                           preferred_element_type=jnp.float32) + bi)
        ffo = jnp.dot(ff.astype(jnp.bfloat16), wo2_l,
                      preferred_element_type=jnp.float32) + bo2
        x = _layer_norm(ffo + x, ln2g, ln2b)

    # Final fc for all batch rows: gather last tokens with a 0/1 selection
    # matmul, one (B, H) @ (H, 128) matmul, one lane-dense store.
    last = jnp.dot(sel_ref[...], x.astype(jnp.bfloat16),
                   preferred_element_type=jnp.float32)              # (B, H)
    logits = jnp.dot(last.astype(jnp.bfloat16), wf_ref[...],
                     preferred_element_type=jnp.float32) + _row(vecw_ref, 2 * L)
    out_ref[...] = logits                                           # (B, 128)


def _attention_constants(input_ids, num_heads, hidden, head_dim):
    """Tiny constant matrices consumed by the kernel (built in plain JAX)."""
    B, S = input_ids.shape
    BS = B * S
    neg = jnp.finfo(jnp.float32).min

    # Additive score mask over rows/cols ordered (head, batch, seq):
    # 0 where query & key share the same (head, batch) block AND the key token
    # is not padding, else finfo(f32).min.  (A fully padded sequence degrades
    # to a near-uniform softmax — benign, matches HF behavior.)
    blk = jnp.repeat(jnp.arange(num_heads * B, dtype=jnp.int32), S)   # (nh*B*S,)
    same_blk = blk[:, None] == blk[None, :]
    key_valid = jnp.tile((input_ids != 0).reshape(-1), num_heads)     # (nh*B*S,)
    mask_big = jnp.where(same_blk & key_valid[None, :], 0.0, neg).astype(jnp.float32)

    # Row-replication matrix: (nh*B*S, B*S) vertical stack of identities.
    rep = jnp.tile(jnp.eye(BS, dtype=jnp.float32), (num_heads, 1)).astype(jnp.bfloat16)

    # Head lane mask: row block h keeps only lanes h*hd : (h+1)*hd.
    hmask = (jnp.arange(hidden)[None, :] // head_dim ==
             jnp.arange(num_heads * BS)[:, None] // BS).astype(jnp.float32)

    # Last-token selection matrix: (B, B*S), one-hot at row b*S + S-1.
    sel = jnp.zeros((B, BS), jnp.float32)
    sel = sel.at[jnp.arange(B), jnp.arange(B) * S + S - 1].set(1.0).astype(jnp.bfloat16)
    return mask_big, rep, hmask, sel


def bert4rec_forward(input_ids, params):
    B, S = input_ids.shape
    H, V = HIDDEN, VOCAB
    hd = H // HEADS

    # ---- glue (plain JAX): embedding gathers + mask/constant construction ----
    # TODO(synk): embedding-table gathers stay in plain JAX (irregular gather).
    word = params["word_emb"][input_ids]                  # (B, S, H)
    pos = params["pos_emb"][:S][None, :, :]               # (1, S, H)
    tok = params["type_emb"][0][None, None, :]            # (1, 1, H) token_type=0
    emb = (word + pos + tok).astype(jnp.float32).reshape(B * S, H)

    mask_big, rep, hmask, sel = _attention_constants(input_ids, HEADS, H, hd)

    kernel = functools.partial(bert4rec_kernel, num_heads=HEADS)
    vmem_spec = pl.BlockSpec(memory_space=pltpu.MemorySpace.VMEM)
    # Single kernel invocation (no grid): everything fits VMEM on every TPU
    # generation; explicit whole-array VMEM placement, no pipelining.
    # (On v7x with a large batch one could add a leading "parallel" grid axis
    #  to shard the batch across the two TensorCores; not worth it at B=2.)
    logits_pad = pl.pallas_call(
        kernel,
        out_shape=jax.ShapeDtypeStruct((B, WIDE), jnp.float32),
        in_specs=[vmem_spec] * 12,
        out_specs=vmem_spec,
    )(emb, mask_big, rep, hmask, sel,
      params["wqkv"], params["wo"], params["wi"], params["wo2"], params["wf"],
      params["vech"], params["vecw"])
    return logits_pad[:, :V]                              # slice padded lanes to V


def init_params(key):
    H, L, V, I = HIDDEN, LAYERS, VOCAB, INTER
    assert I == WIDE and 3 * H <= WIDE and V <= WIDE
    std = 0.02  # BERT initializer_range
    ks = iter(jax.random.split(key, 16))

    def n(shape):
        return (std * jax.random.normal(next(ks), shape)).astype(jnp.float32)

    word = n((V, H)).at[0].set(0.0)                       # padding_idx = 0

    # Fused, lane-padded QKV weight: cols 0:H=Wq, H:2H=Wk, 2H:3H=Wv, rest 0.
    wq, wk, wv = n((L, H, H)), n((L, H, H)), n((L, H, H))
    wqkv = jnp.zeros((L, H, WIDE), jnp.float32)
    wqkv = wqkv.at[:, :, 0:H].set(wq).at[:, :, H:2 * H].set(wk).at[:, :, 2 * H:3 * H].set(wv)

    # Final fc weight padded to 128 lanes (cols V:128 are zero).
    wf = jnp.zeros((H, WIDE), jnp.float32).at[:, :V].set(n((H, V)))

    # Packed H-wide vectors: [emb-LN g, emb-LN b] + per layer
    # [bo, ln1_g, ln1_b, bo2, ln2_g, ln2_b]   (biases 0, gammas 1, betas 0).
    rows_h = [jnp.ones((H,), jnp.float32), jnp.zeros((H,), jnp.float32)]
    for _ in range(L):
        rows_h += [jnp.zeros((H,), jnp.float32),   # bo
                   jnp.ones((H,), jnp.float32),    # ln1 gamma
                   jnp.zeros((H,), jnp.float32),   # ln1 beta
                   jnp.zeros((H,), jnp.float32),   # bo2
                   jnp.ones((H,), jnp.float32),    # ln2 gamma
                   jnp.zeros((H,), jnp.float32)]   # ln2 beta
    vech = jnp.stack(rows_h)                       # (2 + 6L, H)

    # Packed 128-wide vectors: rows 0..L-1 = fused qkv bias (padded),
    # rows L..2L-1 = intermediate bias, row 2L = fc bias (padded). Zero here.
    vecw = jnp.zeros((2 * L + 1, WIDE), jnp.float32)

    return dict(
        word_emb=word,
        pos_emb=n((MAX_LEN, H)),
        type_emb=n((1, H)),
        wqkv=wqkv.astype(jnp.bfloat16),
        wo=n((L, H, H)).astype(jnp.bfloat16),
        wi=n((L, H, I)).astype(jnp.bfloat16),
        wo2=n((L, I, H)).astype(jnp.bfloat16),
        wf=wf.astype(jnp.bfloat16),
        vech=vech,
        vecw=vecw,
    )


if __name__ == "__main__":
    key = jax.random.PRNGKey(0)
    pkey, ikey = jax.random.split(key)
    params = init_params(pkey)

    input_ids = jax.random.randint(ikey, (BATCH, SEQ), 1, VOCAB, dtype=jnp.int32)
    input_ids = input_ids.at[0, :2].set(0)  # left-pad first sequence -> exercises mask

    logits = jax.block_until_ready(bert4rec_forward(input_ids, params))
    assert logits.shape == (BATCH, VOCAB) and logits.dtype == jnp.float32
    assert bool(jnp.all(jnp.isfinite(logits)))
    print("KERNEL_OK")
</pallas_src>

<mosaic_0001>
module attributes {stable_mosaic.version = 11 : i64} {
  func.func @bert4rec_kernel(%arg0: memref<16x32xf32, #tpu.memory_space<vmem>>, %arg1: memref<64x64xf32, #tpu.memory_space<vmem>>, %arg2: memref<64x16xbf16, #tpu.memory_space<vmem>>, %arg3: memref<64x32xf32, #tpu.memory_space<vmem>>, %arg4: memref<2x16xbf16, #tpu.memory_space<vmem>>, %arg5: memref<2x32x128xbf16, #tpu.memory_space<vmem>>, %arg6: memref<2x32x32xbf16, #tpu.memory_space<vmem>>, %arg7: memref<2x32x128xbf16, #tpu.memory_space<vmem>>, %arg8: memref<2x128x32xbf16, #tpu.memory_space<vmem>>, %arg9: memref<32x128xbf16, #tpu.memory_space<vmem>>, %arg10: memref<14x32xf32, #tpu.memory_space<vmem>>, %arg11: memref<5x128xf32, #tpu.memory_space<vmem>>, %arg12: memref<2x128xf32, #tpu.memory_space<vmem>>) attributes {dimension_semantics = [], scalar_prefetch = 0 : i64, scratch_operands = 0 : i64, tpu.core_type = #tpu.core_type<tc>} {
    %c0 = arith.constant 0 : index
    %c0_0 = arith.constant 0 : index
    %0 = vector.load %arg1[%c0, %c0_0] : memref<64x64xf32, #tpu.memory_space<vmem>>, vector<64x64xf32>
    %c0_1 = arith.constant 0 : index
    %c0_2 = arith.constant 0 : index
    %1 = vector.load %arg2[%c0_1, %c0_2] : memref<64x16xbf16, #tpu.memory_space<vmem>>, vector<64x16xbf16>
    %c0_3 = arith.constant 0 : index
    %c0_4 = arith.constant 0 : index
    %2 = vector.load %arg3[%c0_3, %c0_4] : memref<64x32xf32, #tpu.memory_space<vmem>>, vector<64x32xf32>
    %c0_5 = arith.constant 0 : index
    %c0_6 = arith.constant 0 : index
    %3 = vector.load %arg10[%c0_5, %c0_6] : memref<14x32xf32, #tpu.memory_space<vmem>>, vector<1x32xf32>
    %c1 = arith.constant 1 : index
    %c0_7 = arith.constant 0 : index
    %4 = vector.load %arg10[%c1, %c0_7] : memref<14x32xf32, #tpu.memory_space<vmem>>, vector<1x32xf32>
    %c0_8 = arith.constant 0 : index
    %c0_9 = arith.constant 0 : index
    %5 = vector.load %arg0[%c0_8, %c0_9] : memref<16x32xf32, #tpu.memory_space<vmem>>, vector<16x32xf32>
    %cst = arith.constant dense<0.000000e+00> : vector<16xf32>
    %6 = vector.multi_reduction <add>, %5, %cst [1] : vector<16x32xf32> to vector<16xf32>
    %7 = vector.shape_cast %6 : vector<16xf32> to vector<16x1xf32>
    %cst_10 = arith.constant 3.200000e+01 : f32
    %8 = vector.broadcast %cst_10 : f32 to vector<16x1xf32>
    %9 = arith.divf %7, %8 : vector<16x1xf32>
    %10 = vector.broadcast %9 : vector<16x1xf32> to vector<16x32xf32>
    %11 = arith.subf %5, %10 : vector<16x32xf32>
    %12 = arith.mulf %11, %11 : vector<16x32xf32>
    %cst_11 = arith.constant dense<0.000000e+00> : vector<16xf32>
    %13 = vector.multi_reduction <add>, %12, %cst_11 [1] : vector<16x32xf32> to vector<16xf32>
    %14 = vector.shape_cast %13 : vector<16xf32> to vector<16x1xf32>
    %cst_12 = arith.constant 3.200000e+01 : f32
    %15 = vector.broadcast %cst_12 : f32 to vector<16x1xf32>
    %16 = arith.divf %14, %15 : vector<16x1xf32>
    %17 = vector.broadcast %9 : vector<16x1xf32> to vector<16x32xf32>
    %18 = arith.subf %5, %17 : vector<16x32xf32>
    %cst_13 = arith.constant 9.99999996E-13 : f32
    %19 = vector.broadcast %cst_13 : f32 to vector<16x1xf32>
    %20 = arith.addf %16, %19 : vector<16x1xf32>
    %21 = math.rsqrt %20 : vector<16x1xf32>
    %22 = vector.broadcast %21 : vector<16x1xf32> to vector<16x32xf32>
    %23 = arith.mulf %18, %22 : vector<16x32xf32>
    %24 = vector.broadcast %3 : vector<1x32xf32> to vector<16x32xf32>
    %25 = arith.mulf %23, %24 : vector<16x32xf32>
    %26 = vector.broadcast %4 : vector<1x32xf32> to vector<16x32xf32>
    %27 = arith.addf %25, %26 : vector<16x32xf32>
    %c0_14 = arith.constant 0 : index
    %c0_15 = arith.constant 0 : index
    %28 = vector.load %arg11[%c0_14, %c0_15] : memref<5x128xf32, #tpu.memory_space<vmem>>, vector<1x128xf32>
    %c2 = arith.constant 2 : index
    %c0_16 = arith.constant 0 : index
    %29 = vector.load %arg11[%c2, %c0_16] : memref<5x128xf32, #tpu.memory_space<vmem>>, vector<1x128xf32>
    %c2_17 = arith.constant 2 : index
    %c0_18 = arith.constant 0 : index
    %30 = vector.load %arg10[%c2_17, %c0_18] : memref<14x32xf32, #tpu.memory_space<vmem>>, vector<1x32xf32>
    %c3 = arith.constant 3 : index
    %c0_19 = arith.constant 0 : index
    %31 = vector.load %arg10[%c3, %c0_19] : memref<14x32xf32, #tpu.memory_space<vmem>>, vector<1x32xf32>
    %c4 = arith.constant 4 : index
    %c0_20 = arith.constant 0 : index
    %32 = vector.load %arg10[%c4, %c0_20] : memref<14x32xf32, #tpu.memory_space<vmem>>, vector<1x32xf32>
    %c5 = arith.constant 5 : index
    %c0_21 = arith.constant 0 : index
    %33 = vector.load %arg10[%c5, %c0_21] : memref<14x32xf32, #tpu.memory_space<vmem>>, vector<1x32xf32>
    %c6 = arith.constant 6 : index
    %c0_22 = arith.constant 0 : index
    %34 = vector.load %arg10[%c6, %c0_22] : memref<14x32xf32, #tpu.memory_space<vmem>>, vector<1x32xf32>
    %c7 = arith.constant 7 : index
    %c0_23 = arith.constant 0 : index
    %35 = vector.load %arg10[%c7, %c0_23] : memref<14x32xf32, #tpu.memory_space<vmem>>, vector<1x32xf32>
    %c0_24 = arith.constant 0 : index
    %c0_25 = arith.constant 0 : index
    %c0_26 = arith.constant 0 : index
    %36 = vector.load %arg5[%c0_24, %c0_25, %c0_26] : memref<2x32x128xbf16, #tpu.memory_space<vmem>>, vector<1x32x128xbf16>
    %37 = vector.shape_cast %36 : vector<1x32x128xbf16> to vector<32x128xbf16>
    %c0_27 = arith.constant 0 : index
    %c0_28 = arith.constant 0 : index
    %c0_29 = arith.constant 0 : index
    %38 = vector.load %arg6[%c0_27, %c0_28, %c0_29] : memref<2x32x32xbf16, #tpu.memory_space<vmem>>, vector<1x32x32xbf16>
    %39 = vector.shape_cast %38 : vector<1x32x32xbf16> to vector<32x32xbf16>
    %c0_30 = arith.constant 0 : index
    %c0_31 = arith.constant 0 : index
    %c0_32 = arith.constant 0 : index
    %40 = vector.load %arg7[%c0_30, %c0_31, %c0_32] : memref<2x32x128xbf16, #tpu.memory_space<vmem>>, vector<1x32x128xbf16>
    %41 = vector.shape_cast %40 : vector<1x32x128xbf16> to vector<32x128xbf16>
    %c0_33 = arith.constant 0 : index
    %c0_34 = arith.constant 0 : index
    %c0_35 = arith.constant 0 : index
    %42 = vector.load %arg8[%c0_33, %c0_34, %c0_35] : memref<2x128x32xbf16, #tpu.memory_space<vmem>>, vector<1x128x32xbf16>
    %43 = vector.shape_cast %42 : vector<1x128x32xbf16> to vector<128x32xbf16>
    %44 = arith.truncf %27 : vector<16x32xf32> to vector<16x32xbf16>
    %cst_36 = arith.constant dense<0.000000e+00> : vector<16x128xf32>
    %45 = tpu.matmul %44, %37, %cst_36 {dimension_numbers = #tpu.dot_dimension_numbers<[1], [0], [0], [1], [0, 0, 1, 1], [], []>} : vector<16x32xbf16>, vector<32x128xbf16>, vector<16x128xf32> -> vector<16x128xf32>
    %46 = vector.broadcast %28 : vector<1x128xf32> to vector<16x128xf32>
    %47 = arith.addf %45, %46 : vector<16x128xf32>
    %48 = arith.truncf %47 : vector<16x128xf32> to vector<16x128xbf16>
    %cst_37 = arith.constant dense<0.000000e+00> : vector<64x128xf32>
    %49 = tpu.matmul %1, %48, %cst_37 {dimension_numbers = #tpu.dot_dimension_numbers<[1], [0], [0], [1], [0, 0, 1, 1], [], []>} : vector<64x16xbf16>, vector<16x128xbf16>, vector<64x128xf32> -> vector<64x128xf32>
    %50 = vector.extract_strided_slice %49 {offsets = [0, 0], sizes = [64, 32], strides = [1, 1]} : vector<64x128xf32> to vector<64x32xf32>
    %cst_38 = arith.constant 0.353553385 : f32
    %51 = vector.broadcast %cst_38 : f32 to vector<64x32xf32>
    %52 = arith.mulf %50, %51 : vector<64x32xf32>
    %53 = vector.extract_strided_slice %49 {offsets = [0, 32], sizes = [64, 32], strides = [1, 1]} : vector<64x128xf32> to vector<64x32xf32>
    %54 = arith.mulf %53, %2 : vector<64x32xf32>
    %55 = vector.extract_strided_slice %49 {offsets = [0, 64], sizes = [64, 32], strides = [1, 1]} : vector<64x128xf32> to vector<64x32xf32>
    %56 = arith.mulf %55, %2 : vector<64x32xf32>
    %57 = arith.truncf %52 : vector<64x32xf32> to vector<64x32xbf16>
    %58 = arith.truncf %54 : vector<64x32xf32> to vector<64x32xbf16>
    %cst_39 = arith.constant dense<0.000000e+00> : vector<64x64xf32>
    %59 = tpu.matmul %57, %58, %cst_39 {dimension_numbers = #tpu.dot_dimension_numbers<[1], [1], [0], [0], [0, 0, 1, 0], [], []>} : vector<64x32xbf16>, vector<64x32xbf16>, vector<64x64xf32> -> vector<64x64xf32>
    %60 = arith.addf %59, %0 : vector<64x64xf32>
    %cst_40 = arith.constant dense<0xFF800000> : vector<64xf32>
    %61 = vector.multi_reduction <maximumf>, %60, %cst_40 [1] : vector<64x64xf32> to vector<64xf32>
    %62 = vector.shape_cast %61 : vector<64xf32> to vector<64x1xf32>
    %63 = vector.broadcast %62 : vector<64x1xf32> to vector<64x64xf32>
    %64 = arith.subf %60, %63 : vector<64x64xf32>
    %65 = math.exp %64 : vector<64x64xf32>
    %cst_41 = arith.constant dense<0.000000e+00> : vector<64xf32>
    %66 = vector.multi_reduction <add>, %65, %cst_41 [1] : vector<64x64xf32> to vector<64xf32>
    %67 = vector.shape_cast %66 : vector<64xf32> to vector<64x1xf32>
    %68 = tpu.reciprocal %67 {approx = true} : vector<64x1xf32> -> vector<64x1xf32>
    %69 = vector.broadcast %68 : vector<64x1xf32> to vector<64x64xf32>
    %70 = arith.mulf %65, %69 : vector<64x64xf32>
    %71 = arith.truncf %70 : vector<64x64xf32> to vector<64x64xbf16>
    %72 = arith.truncf %56 : vector<64x32xf32> to vector<64x32xbf16>
    %cst_42 = arith.constant dense<0.000000e+00> : vector<64x32xf32>
    %73 = tpu.matmul %71, %72, %cst_42 {dimension_numbers = #tpu.dot_dimension_numbers<[1], [0], [0], [1], [0, 0, 1, 1], [], []>} : vector<64x64xbf16>, vector<64x32xbf16>, vector<64x32xf32> -> vector<64x32xf32>
    %74 = vector.extract_strided_slice %73 {offsets = [0, 0], sizes = [16, 32], strides = [1, 1]} : vector<64x32xf32> to vector<16x32xf32>
    %75 = vector.extract_strided_slice %73 {offsets = [16, 0], sizes = [16, 32], strides = [1, 1]} : vector<64x32xf32> to vector<16x32xf32>
    %76 = arith.addf %74, %75 : vector<16x32xf32>
    %77 = vector.extract_strided_slice %73 {offsets = [32, 0], sizes = [16, 32], strides = [1, 1]} : vector<64x32xf32> to vector<16x32xf32>
    %78 = arith.addf %76, %77 : vector<16x32xf32>
    %79 = vector.extract_strided_slice %73 {offsets = [48, 0], sizes = [16, 32], strides = [1, 1]} : vector<64x32xf32> to vector<16x32xf32>
    %80 = arith.addf %78, %79 : vector<16x32xf32>
    %81 = arith.truncf %80 : vector<16x32xf32> to vector<16x32xbf16>
    %cst_43 = arith.constant dense<0.000000e+00> : vector<16x32xf32>
    %82 = tpu.matmul %81, %39, %cst_43 {dimension_numbers = #tpu.dot_dimension_numbers<[1], [0], [0], [1], [0, 0, 1, 1], [], []>} : vector<16x32xbf16>, vector<32x32xbf16>, vector<16x32xf32> -> vector<16x32xf32>
    %83 = vector.broadcast %30 : vector<1x32xf32> to vector<16x32xf32>
    %84 = arith.addf %82, %83 : vector<16x32xf32>
    %85 = arith.addf %84, %27 : vector<16x32xf32>
    %cst_44 = arith.constant dense<0.000000e+00> : vector<16xf32>
    %86 = vector.multi_reduction <add>, %85, %cst_44 [1] : vector<16x32xf32> to vector<16xf32>
    %87 = vector.shape_cast %86 : vector<16xf32> to vector<16x1xf32>
    %cst_45 = arith.constant 3.200000e+01 : f32
    %88 = vector.broadcast %cst_45 : f32 to vector<16x1xf32>
    %89 = arith.divf %87, %88 : vector<16x1xf32>
    %90 = vector.broadcast %89 : vector<16x1xf32> to vector<16x32xf32>
    %91 = arith.subf %85, %90 : vector<16x32xf32>
    %92 = arith.mulf %91, %91 : vector<16x32xf32>
    %cst_46 = arith.constant dense<0.000000e+00> : vector<16xf32>
    %93 = vector.multi_reduction <add>, %92, %cst_46 [1] : vector<16x32xf32> to vector<16xf32>
    %94 = vector.shape_cast %93 : vector<16xf32> to vector<16x1xf32>
    %cst_47 = arith.constant 3.200000e+01 : f32
    %95 = vector.broadcast %cst_47 : f32 to vector<16x1xf32>
    %96 = arith.divf %94, %95 : vector<16x1xf32>
    %97 = vector.broadcast %89 : vector<16x1xf32> to vector<16x32xf32>
    %98 = arith.subf %85, %97 : vector<16x32xf32>
    %cst_48 = arith.constant 9.99999996E-13 : f32
    %99 = vector.broadcast %cst_48 : f32 to vector<16x1xf32>
    %100 = arith.addf %96, %99 : vector<16x1xf32>
    %101 = math.rsqrt %100 : vector<16x1xf32>
    %102 = vector.broadcast %101 : vector<16x1xf32> to vector<16x32xf32>
    %103 = arith.mulf %98, %102 : vector<16x32xf32>
    %104 = vector.broadcast %31 : vector<1x32xf32> to vector<16x32xf32>
    %105 = arith.mulf %103, %104 : vector<16x32xf32>
    %106 = vector.broadcast %32 : vector<1x32xf32> to vector<16x32xf32>
    %107 = arith.addf %105, %106 : vector<16x32xf32>
    %108 = arith.truncf %107 : vector<16x32xf32> to vector<16x32xbf16>
    %cst_49 = arith.constant dense<0.000000e+00> : vector<16x128xf32>
    %109 = tpu.matmul %108, %41, %cst_49 {dimension_numbers = #tpu.dot_dimension_numbers<[1], [0], [0], [1], [0, 0, 1, 1], [], []>} : vector<16x32xbf16>, vector<32x128xbf16>, vector<16x128xf32> -> vector<16x128xf32>
    %110 = vector.broadcast %29 : vector<1x128xf32> to vector<16x128xf32>
    %111 = arith.addf %109, %110 : vector<16x128xf32>
    %cst_50 = arith.constant 5.000000e-01 : f32
    %112 = vector.broadcast %cst_50 : f32 to vector<16x128xf32>
    %113 = arith.mulf %112, %111 : vector<16x128xf32>
    %cst_51 = arith.constant 0.707106769 : f32
    %114 = vector.broadcast %cst_51 : f32 to vector<16x128xf32>
    %115 = arith.mulf %111, %114 : vector<16x128xf32>
    %116 = math.erf %115 : vector<16x128xf32>
    %cst_52 = arith.constant 1.000000e+00 : f32
    %117 = vector.broadcast %cst_52 : f32 to vector<16x128xf32>
    %118 = arith.addf %117, %116 : vector<16x128xf32>
    %119 = arith.mulf %113, %118 : vector<16x128xf32>
    %120 = arith.truncf %119 : vector<16x128xf32> to vector<16x128xbf16>
    %cst_53 = arith.constant dense<0.000000e+00> : vector<16x32xf32>
    %121 = tpu.matmul %120, %43, %cst_53 {dimension_numbers = #tpu.dot_dimension_numbers<[1], [0], [0], [1], [0, 0, 1, 1], [], []>} : vector<16x128xbf16>, vector<128x32xbf16>, vector<16x32xf32> -> vector<16x32xf32>
    %122 = vector.broadcast %33 : vector<1x32xf32> to vector<16x32xf32>
    %123 = arith.addf %121, %122 : vector<16x32xf32>
    %124 = arith.addf %123, %107 : vector<16x32xf32>
    %cst_54 = arith.constant dense<0.000000e+00> : vector<16xf32>
    %125 = vector.multi_reduction <add>, %124, %cst_54 [1] : vector<16x32xf32> to vector<16xf32>
    %126 = vector.shape_cast %125 : vector<16xf32> to vector<16x1xf32>
    %cst_55 = arith.constant 3.200000e+01 : f32
    %127 = vector.broadcast %cst_55 : f32 to vector<16x1xf32>
    %128 = arith.divf %126, %127 : vector<16x1xf32>
    %129 = vector.broadcast %128 : vector<16x1xf32> to vector<16x32xf32>
    %130 = arith.subf %124, %129 : vector<16x32xf32>
    %131 = arith.mulf %130, %130 : vector<16x32xf32>
    %cst_56 = arith.constant dense<0.000000e+00> : vector<16xf32>
    %132 = vector.multi_reduction <add>, %131, %cst_56 [1] : vector<16x32xf32> to vector<16xf32>
    %133 = vector.shape_cast %132 : vector<16xf32> to vector<16x1xf32>
    %cst_57 = arith.constant 3.200000e+01 : f32
    %134 = vector.broadcast %cst_57 : f32 to vector<16x1xf32>
    %135 = arith.divf %133, %134 : vector<16x1xf32>
    %136 = vector.broadcast %128 : vector<16x1xf32> to vector<16x32xf32>
    %137 = arith.subf %124, %136 : vector<16x32xf32>
    %cst_58 = arith.constant 9.99999996E-13 : f32
    %138 = vector.broadcast %cst_58 : f32 to vector<16x1xf32>
    %139 = arith.addf %135, %138 : vector<16x1xf32>
    %140 = math.rsqrt %139 : vector<16x1xf32>
    %141 = vector.broadcast %140 : vector<16x1xf32> to vector<16x32xf32>
    %142 = arith.mulf %137, %141 : vector<16x32xf32>
    %143 = vector.broadcast %34 : vector<1x32xf32> to vector<16x32xf32>
    %144 = arith.mulf %142, %143 : vector<16x32xf32>
    %145 = vector.broadcast %35 : vector<1x32xf32> to vector<16x32xf32>
    %146 = arith.addf %144, %145 : vector<16x32xf32>
    %c1_59 = arith.constant 1 : index
    %c0_60 = arith.constant 0 : index
    %147 = vector.load %arg11[%c1_59, %c0_60] : memref<5x128xf32, #tpu.memory_space<vmem>>, vector<1x128xf32>
    %c3_61 = arith.constant 3 : index
    %c0_62 = arith.constant 0 : index
    %148 = vector.load %arg11[%c3_61, %c0_62] : memref<5x128xf32, #tpu.memory_space<vmem>>, vector<1x128xf32>
    %c8 = arith.constant 8 : index
    %c0_63 = arith.constant 0 : index
    %149 = vector.load %arg10[%c8, %c0_63] : memref<14x32xf32, #tpu.memory_space<vmem>>, vector<1x32xf32>
    %c9 = arith.constant 9 : index
    %c0_64 = arith.constant 0 : index
    %150 = vector.load %arg10[%c9, %c0_64] : memref<14x32xf32, #tpu.memory_space<vmem>>, vector<1x32xf32>
    %c10 = arith.constant 10 : index
    %c0_65 = arith.constant 0 : index
    %151 = vector.load %arg10[%c10, %c0_65] : memref<14x32xf32, #tpu.memory_space<vmem>>, vector<1x32xf32>
    %c11 = arith.constant 11 : index
    %c0_66 = arith.constant 0 : index
    %152 = vector.load %arg10[%c11, %c0_66] : memref<14x32xf32, #tpu.memory_space<vmem>>, vector<1x32xf32>
    %c12 = arith.constant 12 : index
    %c0_67 = arith.constant 0 : index
    %153 = vector.load %arg10[%c12, %c0_67] : memref<14x32xf32, #tpu.memory_space<vmem>>, vector<1x32xf32>
    %c13 = arith.constant 13 : index
    %c0_68 = arith.constant 0 : index
    %154 = vector.load %arg10[%c13, %c0_68] : memref<14x32xf32, #tpu.memory_space<vmem>>, vector<1x32xf32>
    %c1_69 = arith.constant 1 : index
    %c0_70 = arith.constant 0 : index
    %c0_71 = arith.constant 0 : index
    %155 = vector.load %arg5[%c1_69, %c0_70, %c0_71] : memref<2x32x128xbf16, #tpu.memory_space<vmem>>, vector<1x32x128xbf16>
    %156 = vector.shape_cast %155 : vector<1x32x128xbf16> to vector<32x128xbf16>
    %c1_72 = arith.constant 1 : index
    %c0_73 = arith.constant 0 : index
    %c0_74 = arith.constant 0 : index
    %157 = vector.load %arg6[%c1_72, %c0_73, %c0_74] : memref<2x32x32xbf16, #tpu.memory_space<vmem>>, vector<1x32x32xbf16>
    %158 = vector.shape_cast %157 : vector<1x32x32xbf16> to vector<32x32xbf16>
    %c1_75 = arith.constant 1 : index
    %c0_76 = arith.constant 0 : index
    %c0_77 = arith.constant 0 : index
    %159 = vector.load %arg7[%c1_75, %c0_76, %c0_77] : memref<2x32x128xbf16, #tpu.memory_space<vmem>>, vector<1x32x128xbf16>
    %160 = vector.shape_cast %159 : vector<1x32x128xbf16> to vector<32x128xbf16>
    %c1_78 = arith.constant 1 : index
    %c0_79 = arith.constant 0 : index
    %c0_80 = arith.constant 0 : index
    %161 = vector.load %arg8[%c1_78, %c0_79, %c0_80] : memref<2x128x32xbf16, #tpu.memory_space<vmem>>, vector<1x128x32xbf16>
    %162 = vector.shape_cast %161 : vector<1x128x32xbf16> to vector<128x32xbf16>
    %163 = arith.truncf %146 : vector<16x32xf32> to vector<16x32xbf16>
    %cst_81 = arith.constant dense<0.000000e+00> : vector<16x128xf32>
    %164 = tpu.matmul %163, %156, %cst_81 {dimension_numbers = #tpu.dot_dimension_numbers<[1], [0], [0], [1], [0, 0, 1, 1], [], []>} : vector<16x32xbf16>, vector<32x128xbf16>, vector<16x128xf32> -> vector<16x128xf32>
    %165 = vector.broadcast %147 : vector<1x128xf32> to vector<16x128xf32>
    %166 = arith.addf %164, %165 : vector<16x128xf32>
    %167 = arith.truncf %166 : vector<16x128xf32> to vector<16x128xbf16>
    %cst_82 = arith.constant dense<0.000000e+00> : vector<64x128xf32>
    %168 = tpu.matmul %1, %167, %cst_82 {dimension_numbers = #tpu.dot_dimension_numbers<[1], [0], [0], [1], [0, 0, 1, 1], [], []>} : vector<64x16xbf16>, vector<16x128xbf16>, vector<64x128xf32> -> vector<64x128xf32>
    %169 = vector.extract_strided_slice %168 {offsets = [0, 0], sizes = [64, 32], strides = [1, 1]} : vector<64x128xf32> to vector<64x32xf32>
    %cst_83 = arith.constant 0.353553385 : f32
    %170 = vector.broadcast %cst_83 : f32 to vector<64x32xf32>
    %171 = arith.mulf %169, %170 : vector<64x32xf32>
    %172 = vector.extract_strided_slice %168 {offsets = [0, 32], sizes = [64, 32], strides = [1, 1]} : vector<64x128xf32> to vector<64x32xf32>
    %173 = arith.mulf %172, %2 : vector<64x32xf32>
    %174 = vector.extract_strided_slice %168 {offsets = [0, 64], sizes = [64, 32], strides = [1, 1]} : vector<64x128xf32> to vector<64x32xf32>
    %175 = arith.mulf %174, %2 : vector<64x32xf32>
    %176 = arith.truncf %171 : vector<64x32xf32> to vector<64x32xbf16>
    %177 = arith.truncf %173 : vector<64x32xf32> to vector<64x32xbf16>
    %cst_84 = arith.constant dense<0.000000e+00> : vector<64x64xf32>
    %178 = tpu.matmul %176, %177, %cst_84 {dimension_numbers = #tpu.dot_dimension_numbers<[1], [1], [0], [0], [0, 0, 1, 0], [], []>} : vector<64x32xbf16>, vector<64x32xbf16>, vector<64x64xf32> -> vector<64x64xf32>
    %179 = arith.addf %178, %0 : vector<64x64xf32>
    %cst_85 = arith.constant dense<0xFF800000> : vector<64xf32>
    %180 = vector.multi_reduction <maximumf>, %179, %cst_85 [1] : vector<64x64xf32> to vector<64xf32>
    %181 = vector.shape_cast %180 : vector<64xf32> to vector<64x1xf32>
    %182 = vector.broadcast %181 : vector<64x1xf32> to vector<64x64xf32>
    %183 = arith.subf %179, %182 : vector<64x64xf32>
    %184 = math.exp %183 : vector<64x64xf32>
    %cst_86 = arith.constant dense<0.000000e+00> : vector<64xf32>
    %185 = vector.multi_reduction <add>, %184, %cst_86 [1] : vector<64x64xf32> to vector<64xf32>
    %186 = vector.shape_cast %185 : vector<64xf32> to vector<64x1xf32>
    %187 = tpu.reciprocal %186 {approx = true} : vector<64x1xf32> -> vector<64x1xf32>
    %188 = vector.broadcast %187 : vector<64x1xf32> to vector<64x64xf32>
    %189 = arith.mulf %184, %188 : vector<64x64xf32>
    %190 = arith.truncf %189 : vector<64x64xf32> to vector<64x64xbf16>
    %191 = arith.truncf %175 : vector<64x32xf32> to vector<64x32xbf16>
    %cst_87 = arith.constant dense<0.000000e+00> : vector<64x32xf32>
    %192 = tpu.matmul %190, %191, %cst_87 {dimension_numbers = #tpu.dot_dimension_numbers<[1], [0], [0], [1], [0, 0, 1, 1], [], []>} : vector<64x64xbf16>, vector<64x32xbf16>, vector<64x32xf32> -> vector<64x32xf32>
    %193 = vector.extract_strided_slice %192 {offsets = [0, 0], sizes = [16, 32], strides = [1, 1]} : vector<64x32xf32> to vector<16x32xf32>
    %194 = vector.extract_strided_slice %192 {offsets = [16, 0], sizes = [16, 32], strides = [1, 1]} : vector<64x32xf32> to vector<16x32xf32>
    %195 = arith.addf %193, %194 : vector<16x32xf32>
    %196 = vector.extract_strided_slice %192 {offsets = [32, 0], sizes = [16, 32], strides = [1, 1]} : vector<64x32xf32> to vector<16x32xf32>
    %197 = arith.addf %195, %196 : vector<16x32xf32>
    %198 = vector.extract_strided_slice %192 {offsets = [48, 0], sizes = [16, 32], strides = [1, 1]} : vector<64x32xf32> to vector<16x32xf32>
    %199 = arith.addf %197, %198 : vector<16x32xf32>
    %200 = arith.truncf %199 : vector<16x32xf32> to vector<16x32xbf16>
    %cst_88 = arith.constant dense<0.000000e+00> : vector<16x32xf32>
    %201 = tpu.matmul %200, %158, %cst_88 {dimension_numbers = #tpu.dot_dimension_numbers<[1], [0], [0], [1], [0, 0, 1, 1], [], []>} : vector<16x32xbf16>, vector<32x32xbf16>, vector<16x32xf32> -> vector<16x32xf32>
    %202 = vector.broadcast %149 : vector<1x32xf32> to vector<16x32xf32>
    %203 = arith.addf %201, %202 : vector<16x32xf32>
    %204 = arith.addf %203, %146 : vector<16x32xf32>
    %cst_89 = arith.constant dense<0.000000e+00> : vector<16xf32>
    %205 = vector.multi_reduction <add>, %204, %cst_89 [1] : vector<16x32xf32> to vector<16xf32>
    %206 = vector.shape_cast %205 : vector<16xf32> to vector<16x1xf32>
    %cst_90 = arith.constant 3.200000e+01 : f32
    %207 = vector.broadcast %cst_90 : f32 to vector<16x1xf32>
    %208 = arith.divf %206, %207 : vector<16x1xf32>
    %209 = vector.broadcast %208 : vector<16x1xf32> to vector<16x32xf32>
    %210 = arith.subf %204, %209 : vector<16x32xf32>
    %211 = arith.mulf %210, %210 : vector<16x32xf32>
    %cst_91 = arith.constant dense<0.000000e+00> : vector<16xf32>
    %212 = vector.multi_reduction <add>, %211, %cst_91 [1] : vector<16x32xf32> to vector<16xf32>
    %213 = vector.shape_cast %212 : vector<16xf32> to vector<16x1xf32>
    %cst_92 = arith.constant 3.200000e+01 : f32
    %214 = vector.broadcast %cst_92 : f32 to vector<16x1xf32>
    %215 = arith.divf %213, %214 : vector<16x1xf32>
    %216 = vector.broadcast %208 : vector<16x1xf32> to vector<16x32xf32>
    %217 = arith.subf %204, %216 : vector<16x32xf32>
    %cst_93 = arith.constant 9.99999996E-13 : f32
    %218 = vector.broadcast %cst_93 : f32 to vector<16x1xf32>
    %219 = arith.addf %215, %218 : vector<16x1xf32>
    %220 = math.rsqrt %219 : vector<16x1xf32>
    %221 = vector.broadcast %220 : vector<16x1xf32> to vector<16x32xf32>
    %222 = arith.mulf %217, %221 : vector<16x32xf32>
    %223 = vector.broadcast %150 : vector<1x32xf32> to vector<16x32xf32>
    %224 = arith.mulf %222, %223 : vector<16x32xf32>
    %225 = vector.broadcast %151 : vector<1x32xf32> to vector<16x32xf32>
    %226 = arith.addf %224, %225 : vector<16x32xf32>
    %227 = arith.truncf %226 : vector<16x32xf32> to vector<16x32xbf16>
    %cst_94 = arith.constant dense<0.000000e+00> : vector<16x128xf32>
    %228 = tpu.matmul %227, %160, %cst_94 {dimension_numbers = #tpu.dot_dimension_numbers<[1], [0], [0], [1], [0, 0, 1, 1], [], []>} : vector<16x32xbf16>, vector<32x128xbf16>, vector<16x128xf32> -> vector<16x128xf32>
    %229 = vector.broadcast %148 : vector<1x128xf32> to vector<16x128xf32>
    %230 = arith.addf %228, %229 : vector<16x128xf32>
    %cst_95 = arith.constant 5.000000e-01 : f32
    %231 = vector.broadcast %cst_95 : f32 to vector<16x128xf32>
    %232 = arith.mulf %231, %230 : vector<16x128xf32>
    %cst_96 = arith.constant 0.707106769 : f32
    %233 = vector.broadcast %cst_96 : f32 to vector<16x128xf32>
    %234 = arith.mulf %230, %233 : vector<16x128xf32>
    %235 = math.erf %234 : vector<16x128xf32>
    %cst_97 = arith.constant 1.000000e+00 : f32
    %236 = vector.broadcast %cst_97 : f32 to vector<16x128xf32>
    %237 = arith.addf %236, %235 : vector<16x128xf32>
    %238 = arith.mulf %232, %237 : vector<16x128xf32>
    %239 = arith.truncf %238 : vector<16x128xf32> to vector<16x128xbf16>
    %cst_98 = arith.constant dense<0.000000e+00> : vector<16x32xf32>
    %240 = tpu.matmul %239, %162, %cst_98 {dimension_numbers = #tpu.dot_dimension_numbers<[1], [0], [0], [1], [0, 0, 1, 1], [], []>} : vector<16x128xbf16>, vector<128x32xbf16>, vector<16x32xf32> -> vector<16x32xf32>
    %241 = vector.broadcast %152 : vector<1x32xf32> to vector<16x32xf32>
    %242 = arith.addf %240, %241 : vector<16x32xf32>
    %243 = arith.addf %242, %226 : vector<16x32xf32>
    %cst_99 = arith.constant dense<0.000000e+00> : vector<16xf32>
    %244 = vector.multi_reduction <add>, %243, %cst_99 [1] : vector<16x32xf32> to vector<16xf32>
    %245 = vector.shape_cast %244 : vector<16xf32> to vector<16x1xf32>
    %cst_100 = arith.constant 3.200000e+01 : f32
    %246 = vector.broadcast %cst_100 : f32 to vector<16x1xf32>
    %247 = arith.divf %245, %246 : vector<16x1xf32>
    %248 = vector.broadcast %247 : vector<16x1xf32> to vector<16x32xf32>
    %249 = arith.subf %243, %248 : vector<16x32xf32>
    %250 = arith.mulf %249, %249 : vector<16x32xf32>
    %cst_101 = arith.constant dense<0.000000e+00> : vector<16xf32>
    %251 = vector.multi_reduction <add>, %250, %cst_101 [1] : vector<16x32xf32> to vector<16xf32>
    %252 = vector.shape_cast %251 : vector<16xf32> to vector<16x1xf32>
    %cst_102 = arith.constant 3.200000e+01 : f32
    %253 = vector.broadcast %cst_102 : f32 to vector<16x1xf32>
    %254 = arith.divf %252, %253 : vector<16x1xf32>
    %255 = vector.broadcast %247 : vector<16x1xf32> to vector<16x32xf32>
    %256 = arith.subf %243, %255 : vector<16x32xf32>
    %cst_103 = arith.constant 9.99999996E-13 : f32
    %257 = vector.broadcast %cst_103 : f32 to vector<16x1xf32>
    %258 = arith.addf %254, %257 : vector<16x1xf32>
    %259 = math.rsqrt %258 : vector<16x1xf32>
    %260 = vector.broadcast %259 : vector<16x1xf32> to vector<16x32xf32>
    %261 = arith.mulf %256, %260 : vector<16x32xf32>
    %262 = vector.broadcast %153 : vector<1x32xf32> to vector<16x32xf32>
    %263 = arith.mulf %261, %262 : vector<16x32xf32>
    %264 = vector.broadcast %154 : vector<1x32xf32> to vector<16x32xf32>
    %265 = arith.addf %263, %264 : vector<16x32xf32>
    %c0_104 = arith.constant 0 : index
    %c0_105 = arith.constant 0 : index
    %266 = vector.load %arg4[%c0_104, %c0_105] : memref<2x16xbf16, #tpu.memory_space<vmem>>, vector<2x16xbf16>
    %267 = arith.truncf %265 : vector<16x32xf32> to vector<16x32xbf16>
    %cst_106 = arith.constant dense<0.000000e+00> : vector<2x32xf32>
    %268 = tpu.matmul %266, %267, %cst_106 {dimension_numbers = #tpu.dot_dimension_numbers<[1], [0], [0], [1], [0, 0, 1, 1], [], []>} : vector<2x16xbf16>, vector<16x32xbf16>, vector<2x32xf32> -> vector<2x32xf32>
    %269 = arith.truncf %268 : vector<2x32xf32> to vector<2x32xbf16>
    %c0_107 = arith.constant 0 : index
    %c0_108 = arith.constant 0 : index
    %270 = vector.load %arg9[%c0_107, %c0_108] : memref<32x128xbf16, #tpu.memory_space<vmem>>, vector<32x128xbf16>
    %cst_109 = arith.constant dense<0.000000e+00> : vector<2x128xf32>
    %271 = tpu.matmul %269, %270, %cst_109 {dimension_numbers = #tpu.dot_dimension_numbers<[1], [0], [0], [1], [0, 0, 1, 1], [], []>} : vector<2x32xbf16>, vector<32x128xbf16>, vector<2x128xf32> -> vector<2x128xf32>
    %c4_110 = arith.constant 4 : index
    %c0_111 = arith.constant 0 : index
    %272 = vector.load %arg11[%c4_110, %c0_111] : memref<5x128xf32, #tpu.memory_space<vmem>>, vector<1x128xf32>
    %273 = vector.broadcast %272 : vector<1x128xf32> to vector<2x128xf32>
    %274 = arith.addf %271, %273 : vector<2x128xf32>
    %c0_112 = arith.constant 0 : index
    %c0_113 = arith.constant 0 : index
    %275 = vector.load %arg12[%c0_112, %c0_113] : memref<2x128xf32, #tpu.memory_space<vmem>>, vector<2x128xf32>
    tpu.vector_store %arg12[%c0_112, %c0_113], %274 {strides = array<i32>} : memref<2x128xf32, #tpu.memory_space<vmem>>, vector<2x128xf32>,
    return
  }
}

</mosaic_0001>

<llo_original>
// kernel: tpu_custom_call.1
$region0: #{tpu_custom_call.1}
  #allocation0 [shape = 'u32[]', space=smem, size = 0x4, offset = 0x4, fixed_abs, tag = 'smem constant byte address 0x4 - core index']
  #allocation1 [shape = 'u32[144,128]{1,0:T(1,128)}', space=vmem, size = 0x12000, scoped, tag = 'internal scratch']
  %s0 = inlined_call_operand.vmem [shape: f32[16,32], index: 0, kind: input, shape index: {}]
  %s1 = inlined_call_operand.vmem [shape: f32[64,64], index: 1, kind: input, shape index: {}]
  %s2 = inlined_call_operand.vmem [shape: bf16[64,16], index: 2, kind: input, shape index: {}]
  %s3 = inlined_call_operand.vmem [shape: f32[64,32], index: 3, kind: input, shape index: {}]
  %s4 = inlined_call_operand.vmem [shape: bf16[2,16], index: 4, kind: input, shape index: {}]
  %s5 = inlined_call_operand.vmem [shape: bf16[2,32,128], index: 5, kind: input, shape index: {}]
  %s6 = inlined_call_operand.vmem [shape: bf16[2,32,32], index: 6, kind: input, shape index: {}]
  %s7 = inlined_call_operand.vmem [shape: bf16[2,32,128], index: 7, kind: input, shape index: {}]
  %s8 = inlined_call_operand.vmem [shape: bf16[2,128,32], index: 8, kind: input, shape index: {}]
  %s9 = inlined_call_operand.vmem [shape: bf16[32,128], index: 9, kind: input, shape index: {}]
  %s10 = inlined_call_operand.vmem [shape: f32[14,32], index: 10, kind: input, shape index: {}]
  %s11 = inlined_call_operand.vmem [shape: f32[5,128], index: 11, kind: input, shape index: {}]
  %s12 = inlined_call_operand.hbm [shape: f32[2,128], index: 12, kind: output, shape index: {}]
  %s13 = sld [smem:[#allocation0]]
  $region58: #{tpu_custom_call.1} parent=0
    _
  %s15 = ssub.s32 1, %s13
  %s16 = scalar_select 0, %s15, %s13
  $region1: #{tpu_custom_call.1} parent=0
    #allocation2 [shape = 'u8[1024]{0}', space=vmem, size = 0x400, scoped, tag = 'output window, operand 0, single buffered']
    #allocation3 [shape = 's32[1]{0}', space=sflag, size = 0x4, scoped, tag = 'scoped memory for tpu_custom_call.1']
    %17 = vsyncpa [#allocation3], 0
    // Predicated region
    $region2: #{tpu_custom_call.1} parent=1 // pred_check
      _
    $region3: #{tpu_custom_call.1} parent=1 // pred_check_branch
      %19 = sbr.rel (0) target = $region5
    $region4: #{tpu_custom_call.1} parent=1 // pred_region
      _
    $region5: #{tpu_custom_call.1} parent=1 // pred_fallthru
      _
    // Predicated region
    $region6: #{tpu_custom_call.1} parent=1 // pred_check
      _
    $region7: #{tpu_custom_call.1} parent=1 // pred_check_branch
      %21 = sbr.rel (0) target = $region9
    $region8: #{tpu_custom_call.1} parent=1 // pred_region
      _
    $region9: #{tpu_custom_call.1} parent=1 // pred_fallthru
      _
    // Predicated region
    $region10: #{tpu_custom_call.1} parent=1 // pred_check
      _
    $region11: #{tpu_custom_call.1} parent=1 // pred_check_branch
      %23 = sbr.rel (0) target = $region13
    $region12: #{tpu_custom_call.1} parent=1 // pred_region
      _
    $region13: #{tpu_custom_call.1} parent=1 // pred_fallthru
      _
    // Predicated region
    $region14: #{tpu_custom_call.1} parent=1 // pred_check
      _
    $region15: #{tpu_custom_call.1} parent=1 // pred_check_branch
      %25 = sbr.rel (0) target = $region17
    $region16: #{tpu_custom_call.1} parent=1 // pred_region
      _
    $region17: #{tpu_custom_call.1} parent=1 // pred_fallthru
      _
    // Predicated region
    $region18: #{tpu_custom_call.1} parent=1 // pred_check
      _
    $region19: #{tpu_custom_call.1} parent=1 // pred_check_branch
      %27 = sbr.rel (0) target = $region21
    $region20: #{tpu_custom_call.1} parent=1 // pred_region
      _
    $region21: #{tpu_custom_call.1} parent=1 // pred_fallthru
      _
    // Predicated region
    $region22: #{tpu_custom_call.1} parent=1 // pred_check
      _
    $region23: #{tpu_custom_call.1} parent=1 // pred_check_branch
      %29 = sbr.rel (0) target = $region25
    $region24: #{tpu_custom_call.1} parent=1 // pred_region
      _
    $region25: #{tpu_custom_call.1} parent=1 // pred_fallthru
      _
    // Predicated region
    $region26: #{tpu_custom_call.1} parent=1 // pred_check
      _
    $region27: #{tpu_custom_call.1} parent=1 // pred_check_branch
      %31 = sbr.rel (0) target = $region29
    $region28: #{tpu_custom_call.1} parent=1 // pred_region
      _
    $region29: #{tpu_custom_call.1} parent=1 // pred_fallthru
      _
    // Predicated region
    $region30: #{tpu_custom_call.1} parent=1 // pred_check
      _
    $region31: #{tpu_custom_call.1} parent=1 // pred_check_branch
      %33 = sbr.rel (0) target = $region33
    $region32: #{tpu_custom_call.1} parent=1 // pred_region
      _
    $region33: #{tpu_custom_call.1} parent=1 // pred_fallthru
      _
    // Predicated region
    $region34: #{tpu_custom_call.1} parent=1 // pred_check
      _
    $region35: #{tpu_custom_call.1} parent=1 // pred_check_branch
      %35 = sbr.rel (0) target = $region37
    $region36: #{tpu_custom_call.1} parent=1 // pred_region
      _
    $region37: #{tpu_custom_call.1} parent=1 // pred_fallthru
      _
    // Predicated region
    $region38: #{tpu_custom_call.1} parent=1 // pred_check
      _
    $region39: #{tpu_custom_call.1} parent=1 // pred_check_branch
      %37 = sbr.rel (0) target = $region41
    $region40: #{tpu_custom_call.1} parent=1 // pred_region
      _
    $region41: #{tpu_custom_call.1} parent=1 // pred_fallthru
      _
    // Predicated region
    $region42: #{tpu_custom_call.1} parent=1 // pred_check
      _
    $region43: #{tpu_custom_call.1} parent=1 // pred_check_branch
      %39 = sbr.rel (0) target = $region45
    $region44: #{tpu_custom_call.1} parent=1 // pred_region
      _
    $region45: #{tpu_custom_call.1} parent=1 // pred_fallthru
      _
    // Predicated region
    $region46: #{tpu_custom_call.1} parent=1 // pred_check
      _
    $region47: #{tpu_custom_call.1} parent=1 // pred_check_branch
      %41 = sbr.rel (0) target = $region49
    $region48: #{tpu_custom_call.1} parent=1 // pred_region
      _
    $region49: #{tpu_custom_call.1} parent=1 // pred_fallthru
      _
    %v43 = vld [vmem:[%s1] sm:$0xff]
    %v44 = vld [vmem:[%s1 + $0x8] sm:$0xff]
    %v45 = vld [vmem:[%s1 + $0x10] sm:$0xff]
    %v46 = vld [vmem:[%s1 + $0x18] sm:$0xff]
    %v47 = vld [vmem:[%s1 + $0x20] sm:$0xff]
    %v48 = vld [vmem:[%s1 + $0x28] sm:$0xff]
    %v49 = vld [vmem:[%s1 + $0x30] sm:$0xff]
    %v50 = vld [vmem:[%s1 + $0x38] sm:$0xff]
    %v51 = vld [vmem:[%s2] sm:$0xf]
    %v52 = vld [vmem:[%s2 + $0x4] sm:$0xf]
    %v53 = vld [vmem:[%s2 + $0x8] sm:$0xf]
    %v54 = vld [vmem:[%s2 + $0xc] sm:$0xf]
    %v55 = vld [vmem:[%s2 + $0x10] sm:$0xf]
    %v56 = vld [vmem:[%s2 + $0x14] sm:$0xf]
    %v57 = vld [vmem:[%s2 + $0x18] sm:$0xf]
    %v58 = vld [vmem:[%s2 + $0x1c] sm:$0xf]
    %v59 = vld [vmem:[%s3] sm:$0xff]
    %v60 = vld [vmem:[%s3 + $0x8] sm:$0xff]
    %v61 = vld [vmem:[%s3 + $0x10] sm:$0xff]
    %v62 = vld [vmem:[%s3 + $0x18] sm:$0xff]
    %v63 = vld [vmem:[%s3 + $0x20] sm:$0xff]
    %v64 = vld [vmem:[%s3 + $0x28] sm:$0xff]
    %v65 = vld [vmem:[%s3 + $0x30] sm:$0xff]
    %v66 = vld [vmem:[%s3 + $0x38] sm:$0xff]
    %v67 = vld [vmem:[%s10] sm:$0x1]
    %v68 = vld [vmem:[%s10 + $0x1] sm:$0x1]
    %v69 = vld [vmem:[%s0] sm:$0xff]
    %v70 = vld [vmem:[%s0 + $0x8] sm:$0xff]
    %vm71 = vcmask 261120
    %v72 = vsel %vm71, %v69, 0.0
    %73 = vadd.xlane.f32.xlu0 %v72
    %v74 = vpop.xlane.xlu0 %73
    %v75 = vsel %vm71, %v70, 0.0
    %76 = vadd.xlane.f32.xlu0 %v75
    %v77 = vpop.xlane.xlu0 %76
    %v78 = vrcp.pop 32.0
    %v79 = vmul.f32 %v74, %v78
    %v80 = vmul.f32 %v77, %v78
    %v81 = vsub.f32 %v69, %v79
    %v82 = vsub.f32 %v70, %v80
    %v83 = vmul.f32 %v81, %v81
    %v84 = vmul.f32 %v82, %v82
    %v85 = vsel %vm71, %v83, 0.0
    %86 = vadd.xlane.f32.xlu0 %v85
    %v87 = vpop.xlane.xlu0 %86
    %v88 = vsel %vm71, %v84, 0.0
    %89 = vadd.xlane.f32.xlu0 %v88
    %v90 = vpop.xlane.xlu0 %89
    %v91 = vmul.f32 %v87, %v78
    %v92 = vmul.f32 %v90, %v78
    %v93 = vadd.f32 %v91, 1e-12
    %v94 = vadd.f32 %v92, 1e-12
    %v95 = vrsqrt.pop %v93
    %v96 = vrsqrt.pop %v94
    %v97 = vmul.f32 %v81, %v95
    %v98 = vmul.f32 %v82, %v96
    %v99 = vlaneseq
    %v100 = vshrl.u32 %v99, 7
    %v101 = vsub.s32 0, %v100
    %v102 = vrot.slane %v67, %v101
    %v103 = vmul.f32 %v97, %v102
    %v104 = vmul.f32 %v98, %v102
    %v105 = vlaneseq
    %v106 = vshrl.u32 %v105, 7
    %v107 = vsub.s32 0, %v106
    %v108 = vrot.slane %v68, %v107
    %v109 = vadd.f32 %v103, %v108
    %v110 = vadd.f32 %v104, %v108
    %v111 = vld [vmem:[%s11] sm:$0x1]
    %v112 = vld [vmem:[%s11 + $0x2] sm:$0x1]
    %v113 = vld [vmem:[%s10 + $0x2] sm:$0x1]
    %v114 = vld [vmem:[%s10 + $0x3] sm:$0x1]
    %v115 = vld [vmem:[%s10 + $0x4] sm:$0x1]
    %v116 = vld [vmem:[%s10 + $0x5] sm:$0x1]
    %v117 = vld [vmem:[%s10 + $0x6] sm:$0x1]
    %v118 = vld [vmem:[%s10 + $0x7] sm:$0x1]
    %v119 = vld [vmem:[%s5] sm:$0xf]
    %v120 = vld [vmem:[%s5 + $0x4] sm:$0xf]
    %v121 = vld [vmem:[%s5 + $0x8] sm:$0xf]
    %v122 = vld [vmem:[%s5 + $0xc] sm:$0xf]
    %v123 = vld [vmem:[%s6] sm:$0xf]
    %v124 = vld [vmem:[%s6 + $0x4] sm:$0xf]
    %v125 = vld [vmem:[%s6 + $0x8] sm:$0xf]
    %v126 = vld [vmem:[%s6 + $0xc] sm:$0xf]
    %v127 = vld [vmem:[%s7] sm:$0xf]
    %v128 = vld [vmem:[%s7 + $0x4] sm:$0xf]
    %v129 = vld [vmem:[%s7 + $0x8] sm:$0xf]
    %v130 = vld [vmem:[%s7 + $0xc] sm:$0xf]
    %v131 = vld [vmem:[%s8] sm:$0xf]
    %v132 = vld [vmem:[%s8 + $0x4] sm:$0xf]
    %v133 = vld [vmem:[%s8 + $0x8] sm:$0xf]
    %v134 = vld [vmem:[%s8 + $0xc] sm:$0xf]
    %v135 = vld [vmem:[%s8 + $0x10] sm:$0xf]
    %v136 = vld [vmem:[%s8 + $0x14] sm:$0xf]
    %v137 = vld [vmem:[%s8 + $0x18] sm:$0xf]
    %v138 = vld [vmem:[%s8 + $0x1c] sm:$0xf]
    %v139 = vld [vmem:[%s8 + $0x20] sm:$0xf]
    %v140 = vld [vmem:[%s8 + $0x24] sm:$0xf]
    %v141 = vld [vmem:[%s8 + $0x28] sm:$0xf]
    %v142 = vld [vmem:[%s8 + $0x2c] sm:$0xf]
    %v143 = vld [vmem:[%s8 + $0x30] sm:$0xf]
    %v144 = vld [vmem:[%s8 + $0x34] sm:$0xf]
    %v145 = vld [vmem:[%s8 + $0x38] sm:$0xf]
    %v146 = vld [vmem:[%s8 + $0x3c] sm:$0xf]
    %v147 = vpack.c.bf16 %v110, %v109
    %v148 = vlaneseq
    %v149 = vshrl.u32 %v148, 7
    %v150 = vsub.s32 0, %v149
    %v151 = vrot.slane %v111, %v150
    %v156 = vunpack.c.l.b16 %v119
    %v157 = vunpack.c.l.b16 %v120
    %v158 = vunpack.c.l.b16 %v121
    %v159 = vunpack.c.l.b16 %v122
    %v160 = vpack.c.b16 %v157, %v156
    %v161 = vpack.c.b16 %v159, %v158
    %v165 = vsel %vm71, %v147, 0
    %167 = vmatprep.subr.bf16.mxu0 0
    %168 = vmatpush1.bf16.msra.mxu0 0
    %169 = vmatprep.subr.bf16.mxu0 0
    %170 = vmatpush1.bf16.msra.mxu0 0
    %171 = vmatprep.subr.bf16.mxu0 0
    %172 = vmatpush1.bf16.msra.mxu0 0
    %173 = vmatprep.subr.bf16.mxu0 0
    %174 = vmatpush1.bf16.msra.mxu0 0
    %175 = vmatprep.subr.bf16.mxu0 0
    %176 = vmatpush1.bf16.msra.mxu0 0
    %177 = vmatprep.subr.bf16.mxu0 0
    %178 = vmatpush1.bf16.msra.mxu0 0
    %179 = vmatprep.subr.bf16.mxu0 0
    %180 = vmatpush1.bf16.msra.mxu0 %v161
    %181 = vmatprep.subr.bf16.mxu0 0
    %182 = vmatpush1.bf16.msra.mxu0 %v160
    %183 = vmatprep.subr.bf16.mxu0 0
    %184 = vmatpush2.bf16.msra.mxu0 0
    %185 = vmatprep.subr.bf16.mxu0 0
    %186 = vmatpush2.bf16.msra.mxu0 0
    %187 = vmatprep.subr.bf16.mxu0 0
    %188 = vmatpush2.bf16.msra.mxu0 0
    %189 = vmatprep.subr.bf16.mxu0 0
    %190 = vmatpush2.bf16.msra.mxu0 0
    %191 = vmatprep.subr.bf16.mxu0 0
    %192 = vmatpush2.bf16.msra.mxu0 0
    %193 = vmatprep.subr.bf16.mxu0 0
    %194 = vmatpush2.bf16.msra.mxu0 0
    %195 = vmatprep.subr.bf16.mxu0 0
    %196 = vmatpush2.bf16.msra.mxu0 0
    %197 = vmatprep.subr.bf16.mxu0 0
    %198 = vmatpush2.bf16.msra.mxu0 0
    %199 = vmatprep.mubr.bf16.mxu0 0
    %200 = vmatmul.mubr.bf16.gmra.mxu0 %v165
    %v201 = vpop.f32.mrf.mxu0
    %v202 = vadd.f32 %v151, %v201
    %v203 = vpop.f32.mrf.mxu0
    %v204 = vpop.f32.mrf.mxu0
    %v205 = vadd.f32 %v151, %v204
    %v206 = vpop.f32.mrf.mxu0
    %207 = vdwg.mxu0
    %v208 = vpack.c.bf16 %v205, %v202
    %v217 = vunpack.c.l.b16 %v51
    %v218 = vunpack.c.l.b16 %v52
    %v219 = vunpack.c.l.b16 %v53
    %v220 = vunpack.c.l.b16 %v54
    %v221 = vunpack.c.l.b16 %v55
    %v222 = vunpack.c.l.b16 %v56
    %v223 = vunpack.c.l.b16 %v57
    %v224 = vunpack.c.l.b16 %v58
    %v225 = vpack.c.b16 %v218, %v217
    %v226 = vpack.c.b16 %v220, %v219
    %v227 = vpack.c.b16 %v222, %v221
    %v228 = vpack.c.b16 %v224, %v223
    %vm229 = vcmask 130048
    %v231 = vsel %vm229, %v225, 0
    %v234 = vsel %vm229, %v226, 0
    %v237 = vsel %vm229, %v227, 0
    %v240 = vsel %vm229, %v228, 0
    %242 = vmatprep.subr.bf16.mxu0 0
    %243 = vmatpush1.bf16.msra.mxu0 0
    %244 = vmatprep.subr.bf16.mxu0 0
    %245 = vmatpush1.bf16.msra.mxu0 0
    %246 = vmatprep.subr.bf16.mxu0 0
    %247 = vmatpush1.bf16.msra.mxu0 0
    %248 = vmatprep.subr.bf16.mxu0 0
    %249 = vmatpush1.bf16.msra.mxu0 0
    %250 = vmatprep.subr.bf16.mxu0 0
    %251 = vmatpush1.bf16.msra.mxu0 0
    %252 = vmatprep.subr.bf16.mxu0 0
    %253 = vmatpush1.bf16.msra.mxu0 0
    %254 = vmatprep.subr.bf16.mxu0 0
    %255 = vmatpush1.bf16.msra.mxu0 0
    %256 = vmatprep.subr.bf16.mxu0 0
    %257 = vmatpush1.bf16.msra.mxu0 %v208
    %258 = vmatprep.subr.bf16.mxu0 0
    %259 = vmatpush2.bf16.msra.mxu0 0
    %260 = vmatprep.subr.bf16.mxu0 0
    %261 = vmatpush2.bf16.msra.mxu0 0
    %262 = vmatprep.subr.bf16.mxu0 0
    %263 = vmatpush2.bf16.msra.mxu0 0
    %264 = vmatprep.subr.bf16.mxu0 0
    %265 = vmatpush2.bf16.msra.mxu0 0
    %266 = vmatprep.subr.bf16.mxu0 0
    %267 = vmatpush2.bf16.msra.mxu0 0
    %268 = vmatprep.subr.bf16.mxu0 0
    %269 = vmatpush2.bf16.msra.mxu0 0
    %270 = vmatprep.subr.bf16.mxu0 0
    %271 = vmatpush2.bf16.msra.mxu0 0
    %272 = vmatprep.subr.bf16.mxu0 0
    %273 = vmatpush2.bf16.msra.mxu0 0
    %274 = vmatprep.mubr.bf16.mxu0 0
    %275 = vmatmul.mubr.bf16.gmra.mxu0 %v231
    %v276 = vpop.f32.mrf.mxu0
    %v277 = vadd.f32 0.0, %v276
    %v278 = vpop.f32.mrf.mxu0
    %v279 = vpop.f32.mrf.mxu0
    %v280 = vadd.f32 0.0, %v279
    %v281 = vpop.f32.mrf.mxu0
    %282 = vmatprep.mubr.bf16.mxu0 0
    %283 = vmatmul.mubr.bf16.gmra.mxu0 %v234
    %v284 = vpop.f32.mrf.mxu0
    %v285 = vadd.f32 0.0, %v284
    %v286 = vpop.f32.mrf.mxu0
    %v287 = vpop.f32.mrf.mxu0
    %v288 = vadd.f32 0.0, %v287
    %v289 = vpop.f32.mrf.mxu0
    %290 = vmatprep.mubr.bf16.mxu0 0
    %291 = vmatmul.mubr.bf16.gmra.mxu0 %v237
    %v292 = vpop.f32.mrf.mxu0
    %v293 = vadd.f32 0.0, %v292
    %v294 = vpop.f32.mrf.mxu0
    %v295 = vpop.f32.mrf.mxu0
    %v296 = vadd.f32 0.0, %v295
    %v297 = vpop.f32.mrf.mxu0
    %298 = vmatprep.mubr.bf16.mxu0 0
    %299 = vmatmul.mubr.bf16.gmra.mxu0 %v240
    %v300 = vpop.f32.mrf.mxu0
    %v301 = vadd.f32 0.0, %v300
    %v302 = vpop.f32.mrf.mxu0
    %v303 = vpop.f32.mrf.mxu0
    %v304 = vadd.f32 0.0, %v303
    %v305 = vpop.f32.mrf.mxu0
    %306 = vdwg.mxu0
    %v307 = vmul.f32 %v277, 0.35355338
    %v308 = vmul.f32 %v280, 0.35355338
    %v309 = vmul.f32 %v285, 0.35355338
    %v310 = vmul.f32 %v288, 0.35355338
    %v311 = vmul.f32 %v293, 0.35355338
    %v312 = vmul.f32 %v296, 0.35355338
    %v313 = vmul.f32 %v301, 0.35355338
    %v314 = vmul.f32 %v304, 0.35355338
    %323 = vrot.lane.b32.xlu0 %v59, 32
    %v324 = vpop.permute.xlu0 %323
    %325 = vrot.lane.b32.xlu0 %v60, 32
    %v326 = vpop.permute.xlu0 %325
    %327 = vrot.lane.b32.xlu0 %v61, 32
    %v328 = vpop.permute.xlu0 %327
    %329 = vrot.lane.b32.xlu0 %v62, 32
    %v330 = vpop.permute.xlu0 %329
    %331 = vrot.lane.b32.xlu0 %v63, 32
    %v332 = vpop.permute.xlu0 %331
    %333 = vrot.lane.b32.xlu0 %v64, 32
    %v334 = vpop.permute.xlu0 %333
    %335 = vrot.lane.b32.xlu0 %v65, 32
    %v336 = vpop.permute.xlu0 %335
    %337 = vrot.lane.b32.xlu0 %v66, 32
    %v338 = vpop.permute.xlu0 %337
    %v347 = vmul.f32 %v277, %v324
    %v348 = vmul.f32 %v280, %v326
    %v349 = vmul.f32 %v285, %v328
    %v350 = vmul.f32 %v288, %v330
    %v351 = vmul.f32 %v293, %v332
    %v352 = vmul.f32 %v296, %v334
    %v353 = vmul.f32 %v301, %v336
    %v354 = vmul.f32 %v304, %v338
    %355 = vrot.lane.b32.xlu0 %v59, 64
    %v356 = vpop.permute.xlu0 %355
    %357 = vrot.lane.b32.xlu0 %v60, 64
    %v358 = vpop.permute.xlu0 %357
    %359 = vrot.lane.b32.xlu0 %v61, 64
    %v360 = vpop.permute.xlu0 %359
    %361 = vrot.lane.b32.xlu0 %v62, 64
    %v362 = vpop.permute.xlu0 %361
    %363 = vrot.lane.b32.xlu0 %v63, 64
    %v364 = vpop.permute.xlu0 %363
    %365 = vrot.lane.b32.xlu0 %v64, 64
    %v366 = vpop.permute.xlu0 %365
    %367 = vrot.lane.b32.xlu0 %v65, 64
    %v368 = vpop.permute.xlu0 %367
    %369 = vrot.lane.b32.xlu0 %v66, 64
    %v370 = vpop.permute.xlu0 %369
    %v379 = vmul.f32 %v277, %v356
    %v380 = vmul.f32 %v280, %v358
    %v381 = vmul.f32 %v285, %v360
    %v382 = vmul.f32 %v288, %v362
    %v383 = vmul.f32 %v293, %v364
    %v384 = vmul.f32 %v296, %v366
    %v385 = vmul.f32 %v301, %v368
    %v386 = vmul.f32 %v304, %v370
    %v387 = vpack.c.bf16 %v308, %v307
    %v388 = vpack.c.bf16 %v310, %v309
    %v389 = vpack.c.bf16 %v312, %v311
    %v390 = vpack.c.bf16 %v314, %v313
    %v391 = vpack.c.bf16 %v348, %v347
    %v392 = vpack.c.bf16 %v350, %v349
    %v393 = vpack.c.bf16 %v352, %v351
    %v394 = vpack.c.bf16 %v354, %v353
    %399 = vrot.lane.b32.xlu0 %v391, 96
    %v400 = vpop.permute.xlu0 %399
    %401 = vrot.lane.b32.xlu0 %v392, 96
    %v402 = vpop.permute.xlu0 %401
    %403 = vrot.lane.b32.xlu0 %v393, 96
    %v404 = vpop.permute.xlu0 %403
    %405 = vrot.lane.b32.xlu0 %v394, 96
    %v406 = vpop.permute.xlu0 %405
    %v408 = vsel %vm71, %v387, 0
    %v411 = vsel %vm71, %v388, 0
    %v414 = vsel %vm71, %v389, 0
    %v417 = vsel %vm71, %v390, 0
    %v420 = vsel %vm71, %v400, 0
    %v423 = vsel %vm71, %v402, 0
    %v426 = vsel %vm71, %v404, 0
    %v429 = vsel %vm71, %v406, 0
    %431 = vmatprep.subr.bf16.mxu0 0
    %432 = vmatpush1.bf16.xpose.msra.mxu0 0
    %433 = vmatprep.subr.bf16.mxu0 0
    %434 = vmatpush1.bf16.xpose.msra.mxu0 0
    %435 = vmatprep.subr.bf16.mxu0 0
    %436 = vmatpush1.bf16.xpose.msra.mxu0 0
    %437 = vmatprep.subr.bf16.mxu0 0
    %438 = vmatpush1.bf16.xpose.msra.mxu0 0
    %439 = vmatprep.subr.bf16.mxu0 0
    %440 = vmatpush1.bf16.xpose.msra.mxu0 %v429
    %441 = vmatprep.subr.bf16.mxu0 0
    %442 = vmatpush1.bf16.xpose.msra.mxu0 %v426
    %443 = vmatprep.subr.bf16.mxu0 0
    %444 = vmatpush1.bf16.xpose.msra.mxu0 %v423
    %445 = vmatprep.subr.bf16.mxu0 0
    %446 = vmatpush1.bf16.xpose.msra.mxu0 %v420
    %447 = vmatprep.subr.bf16.mxu0 0
    %448 = vmatpush2.bf16.xpose.msra.mxu0 0
    %449 = vmatprep.subr.bf16.mxu0 0
    %450 = vmatpush2.bf16.xpose.msra.mxu0 0
    %451 = vmatprep.subr.bf16.mxu0 0
    %452 = vmatpush2.bf16.xpose.msra.mxu0 0
    %453 = vmatprep.subr.bf16.mxu0 0
    %454 = vmatpush2.bf16.xpose.msra.mxu0 0
    %455 = vmatprep.subr.bf16.mxu0 0
    %456 = vmatpush2.bf16.xpose.msra.mxu0 0
    %457 = vmatprep.subr.bf16.mxu0 0
    %458 = vmatpush2.bf16.xpose.msra.mxu0 0
    %459 = vmatprep.subr.bf16.mxu0 0
    %460 = vmatpush2.bf16.xpose.msra.mxu0 0
    %461 = vmatprep.subr.bf16.mxu0 0
    %462 = vmatpush2.bf16.xpose.msra.mxu0 0
    %463 = vmatprep.mubr.bf16.mxu0 0
    %464 = vmatmul.mubr.bf16.gmra.mxu0 %v408
    %v465 = vpop.f32.mrf.mxu0
    %v466 = vadd.f32 %v43, %v465
    %v467 = vpop.f32.mrf.mxu0
    %v468 = vpop.f32.mrf.mxu0
    %v469 = vadd.f32 %v44, %v468
    %v470 = vpop.f32.mrf.mxu0
    %471 = vmatprep.mubr.bf16.mxu0 0
    %472 = vmatmul.mubr.bf16.gmra.mxu0 %v411
    %v473 = vpop.f32.mrf.mxu0
    %v474 = vadd.f32 %v45, %v473
    %v475 = vpop.f32.mrf.mxu0
    %v476 = vpop.f32.mrf.mxu0
    %v477 = vadd.f32 %v46, %v476
    %v478 = vpop.f32.mrf.mxu0
    %479 = vmatprep.mubr.bf16.mxu0 0
    %480 = vmatmul.mubr.bf16.gmra.mxu0 %v414
    %v481 = vpop.f32.mrf.mxu0
    %v482 = vadd.f32 %v47, %v481
    %v483 = vpop.f32.mrf.mxu0
    %v484 = vpop.f32.mrf.mxu0
    %v485 = vadd.f32 %v48, %v484
    %v486 = vpop.f32.mrf.mxu0
    %487 = vmatprep.mubr.bf16.mxu0 0
    %488 = vmatmul.mubr.bf16.gmra.mxu0 %v417
    %v489 = vpop.f32.mrf.mxu0
    %v490 = vadd.f32 %v49, %v489
    %v491 = vpop.f32.mrf.mxu0
    %v492 = vpop.f32.mrf.mxu0
    %v493 = vadd.f32 %v50, %v492
    %v494 = vpop.f32.mrf.mxu0
    %495 = vdwg.mxu0
    %vm496 = vcmask 523264
    %v497 = vsel %vm496, %v466, -inf
    %498 = vmax.xlane.f32.xlu0 %v497
    %v499 = vpop.xlane.xlu0 %498
    %v500 = vsel %vm496, %v469, -inf
    %501 = vmax.xlane.f32.xlu0 %v500
    %v502 = vpop.xlane.xlu0 %501
    %v503 = vsel %vm496, %v474, -inf
    %504 = vmax.xlane.f32.xlu0 %v503
    %v505 = vpop.xlane.xlu0 %504
    %v506 = vsel %vm496, %v477, -inf
    %507 = vmax.xlane.f32.xlu0 %v506
    %v508 = vpop.xlane.xlu0 %507
    %v509 = vsel %vm496, %v482, -inf
    %510 = vmax.xlane.f32.xlu0 %v509
    %v511 = vpop.xlane.xlu0 %510
    %v512 = vsel %vm496, %v485, -inf
    %513 = vmax.xlane.f32.xlu0 %v512
    %v514 = vpop.xlane.xlu0 %513
    %v515 = vsel %vm496, %v490, -inf
    %516 = vmax.xlane.f32.xlu0 %v515
    %v517 = vpop.xlane.xlu0 %516
    %v518 = vsel %vm496, %v493, -inf
    %519 = vmax.xlane.f32.xlu0 %v518
    %v520 = vpop.xlane.xlu0 %519
    %v521 = vsub.f32 %v466, %v499
    %v522 = vsub.f32 %v469, %v502
    %v523 = vsub.f32 %v474, %v505
    %v524 = vsub.f32 %v477, %v508
    %v525 = vsub.f32 %v482, %v511
    %v526 = vsub.f32 %v485, %v514
    %v527 = vsub.f32 %v490, %v517
    %v528 = vsub.f32 %v493, %v520
    %v529 = vmul.f32 %v521, 1.442695
    %v530 = vpow.pop %v529
    %v531 = vmul.f32 %v522, 1.442695
    %v532 = vpow.pop %v531
    %v533 = vmul.f32 %v523, 1.442695
    %v534 = vpow.pop %v533
    %v535 = vmul.f32 %v524, 1.442695
    %v536 = vpow.pop %v535
    %v537 = vmul.f32 %v525, 1.442695
    %v538 = vpow.pop %v537
    %v539 = vmul.f32 %v526, 1.442695
    %v540 = vpow.pop %v539
    %v541 = vmul.f32 %v527, 1.442695
    %v542 = vpow.pop %v541
    %v543 = vmul.f32 %v528, 1.442695
    %v544 = vpow.pop %v543
    %v545 = vsel %vm496, %v530, 0.0
    %546 = vadd.xlane.f32.xlu0 %v545
    %v547 = vpop.xlane.xlu0 %546
    %v548 = vsel %vm496, %v532, 0.0
    %549 = vadd.xlane.f32.xlu0 %v548
    %v550 = vpop.xlane.xlu0 %549
    %v551 = vsel %vm496, %v534, 0.0
    %552 = vadd.xlane.f32.xlu0 %v551
    %v553 = vpop.xlane.xlu0 %552
    %v554 = vsel %vm496, %v536, 0.0
    %555 = vadd.xlane.f32.xlu0 %v554
    %v556 = vpop.xlane.xlu0 %555
    %v557 = vsel %vm496, %v538, 0.0
    %558 = vadd.xlane.f32.xlu0 %v557
    %v559 = vpop.xlane.xlu0 %558
    %v560 = vsel %vm496, %v540, 0.0
    %561 = vadd.xlane.f32.xlu0 %v560
    %v562 = vpop.xlane.xlu0 %561
    %v563 = vsel %vm496, %v542, 0.0
    %564 = vadd.xlane.f32.xlu0 %v563
    %v565 = vpop.xlane.xlu0 %564
    %v566 = vsel %vm496, %v544, 0.0
    %567 = vadd.xlane.f32.xlu0 %v566
    %v568 = vpop.xlane.xlu0 %567
    %v569 = vrcp.pop %v547
    %v570 = vrcp.pop %v550
    %v571 = vrcp.pop %v553
    %v572 = vrcp.pop %v556
    %v573 = vrcp.pop %v559
    %v574 = vrcp.pop %v562
    %v575 = vrcp.pop %v565
    %v576 = vrcp.pop %v568
    %v577 = vmul.f32 %v530, %v569
    %v578 = vmul.f32 %v532, %v570
    %v579 = vmul.f32 %v534, %v571
    %v580 = vmul.f32 %v536, %v572
    %v581 = vmul.f32 %v538, %v573
    %v582 = vmul.f32 %v540, %v574
    %v583 = vmul.f32 %v542, %v575
    %v584 = vmul.f32 %v544, %v576
    %v585 = vpack.c.bf16 %v578, %v577
    %v586 = vpack.c.bf16 %v580, %v579
    %v587 = vpack.c.bf16 %v582, %v581
    %v588 = vpack.c.bf16 %v584, %v583
    %v589 = vpack.c.bf16 %v380, %v379
    %v590 = vpack.c.bf16 %v382, %v381
    %v591 = vpack.c.bf16 %v384, %v383
    %v592 = vpack.c.bf16 %v386, %v385
    %597 = vrot.lane.b32.xlu0 %v589, 64
    %v598 = vpop.permute.xlu0 %597
    %599 = vrot.lane.b32.xlu0 %v590, 64
    %v600 = vpop.permute.xlu0 %599
    %601 = vrot.lane.b32.xlu0 %v591, 64
    %v602 = vpop.permute.xlu0 %601
    %603 = vrot.lane.b32.xlu0 %v592, 64
    %v604 = vpop.permute.xlu0 %603
    %v610 = vsel %vm496, %v585, 0
    %v613 = vsel %vm496, %v586, 0
    %v616 = vsel %vm496, %v587, 0
    %v619 = vsel %vm496, %v588, 0
    %621 = vmatprep.subr.bf16.mxu0 0
    %622 = vmatpush1.bf16.msra.mxu0 0
    %623 = vmatprep.subr.bf16.mxu0 0
    %624 = vmatpush1.bf16.msra.mxu0 0
    %625 = vmatprep.subr.bf16.mxu0 0
    %626 = vmatpush1.bf16.msra.mxu0 0
    %627 = vmatprep.subr.bf16.mxu0 0
    %628 = vmatpush1.bf16.msra.mxu0 0
    %629 = vmatprep.subr.bf16.mxu0 0
    %630 = vmatpush1.bf16.msra.mxu0 %v604
    %631 = vmatprep.subr.bf16.mxu0 0
    %632 = vmatpush1.bf16.msra.mxu0 %v602
    %633 = vmatprep.subr.bf16.mxu0 0
    %634 = vmatpush1.bf16.msra.mxu0 %v600
    %635 = vmatprep.subr.bf16.mxu0 0
    %636 = vmatpush1.bf16.msra.mxu0 %v598
    %637 = vmatprep.subr.bf16.mxu0 0
    %638 = vmatpush2.bf16.msra.mxu0 0
    %639 = vmatprep.subr.bf16.mxu0 0
    %640 = vmatpush2.bf16.msra.mxu0 0
    %641 = vmatprep.subr.bf16.mxu0 0
    %642 = vmatpush2.bf16.msra.mxu0 0
    %643 = vmatprep.subr.bf16.mxu0 0
    %644 = vmatpush2.bf16.msra.mxu0 0
    %645 = vmatprep.subr.bf16.mxu0 0
    %646 = vmatpush2.bf16.msra.mxu0 0
    %647 = vmatprep.subr.bf16.mxu0 0
    %648 = vmatpush2.bf16.msra.mxu0 0
    %649 = vmatprep.subr.bf16.mxu0 0
    %650 = vmatpush2.bf16.msra.mxu0 0
    %651 = vmatprep.subr.bf16.mxu0 0
    %652 = vmatpush2.bf16.msra.mxu0 0
    %653 = vmatprep.mubr.bf16.mxu0 0
    %654 = vmatmul.mubr.bf16.gmra.mxu0 %v610
    %v655 = vpop.f32.mrf.mxu0
    %v656 = vadd.f32 0.0, %v655
    %v657 = vpop.f32.mrf.mxu0
    %v658 = vpop.f32.mrf.mxu0
    %v659 = vadd.f32 0.0, %v658
    %v660 = vpop.f32.mrf.mxu0
    %661 = vmatprep.mubr.bf16.mxu0 0
    %662 = vmatmul.mubr.bf16.gmra.mxu0 %v613
    %v663 = vpop.f32.mrf.mxu0
    %v664 = vadd.f32 0.0, %v663
    %v665 = vpop.f32.mrf.mxu0
    %v666 = vpop.f32.mrf.mxu0
    %v667 = vadd.f32 0.0, %v666
    %v668 = vpop.f32.mrf.mxu0
    %669 = vmatprep.mubr.bf16.mxu0 0
    %670 = vmatmul.mubr.bf16.gmra.mxu0 %v616
    %v671 = vpop.f32.mrf.mxu0
    %v672 = vadd.f32 0.0, %v671
    %v673 = vpop.f32.mrf.mxu0
    %v674 = vpop.f32.mrf.mxu0
    %v675 = vadd.f32 0.0, %v674
    %v676 = vpop.f32.mrf.mxu0
    %677 = vmatprep.mubr.bf16.mxu0 0
    %678 = vmatmul.mubr.bf16.gmra.mxu0 %v619
    %v679 = vpop.f32.mrf.mxu0
    %v680 = vadd.f32 0.0, %v679
    %v681 = vpop.f32.mrf.mxu0
    %v682 = vpop.f32.mrf.mxu0
    %v683 = vadd.f32 0.0, %v682
    %v684 = vpop.f32.mrf.mxu0
    %685 = vdwg.mxu0
    %v686 = vadd.f32 %v656, %v664
    %v687 = vadd.f32 %v659, %v667
    %v688 = vadd.f32 %v686, %v672
    %v689 = vadd.f32 %v687, %v675
    %v690 = vadd.f32 %v688, %v680
    %v691 = vadd.f32 %v689, %v683
    %v692 = vpack.c.bf16 %v691, %v690
    %v693 = vlaneseq
    %v694 = vshrl.u32 %v693, 7
    %v695 = vsub.s32 0, %v694
    %v696 = vrot.slane %v113, %v695
    %v701 = vunpack.c.l.b16 %v123
    %v702 = vunpack.c.l.b16 %v124
    %v703 = vunpack.c.l.b16 %v125
    %v704 = vunpack.c.l.b16 %v126
    %v705 = vpack.c.b16 %v702, %v701
    %v706 = vpack.c.b16 %v704, %v703
    %v710 = vsel %vm71, %v692, 0
    %712 = vmatprep.subr.bf16.mxu0 0
    %713 = vmatpush1.bf16.msra.mxu0 0
    %714 = vmatprep.subr.bf16.mxu0 0
    %715 = vmatpush1.bf16.msra.mxu0 0
    %716 = vmatprep.subr.bf16.mxu0 0
    %717 = vmatpush1.bf16.msra.mxu0 0
    %718 = vmatprep.subr.bf16.mxu0 0
    %719 = vmatpush1.bf16.msra.mxu0 0
    %720 = vmatprep.subr.bf16.mxu0 0
    %721 = vmatpush1.bf16.msra.mxu0 0
    %722 = vmatprep.subr.bf16.mxu0 0
    %723 = vmatpush1.bf16.msra.mxu0 0
    %724 = vmatprep.subr.bf16.mxu0 0
    %725 = vmatpush1.bf16.msra.mxu0 %v706
    %726 = vmatprep.subr.bf16.mxu0 0
    %727 = vmatpush1.bf16.msra.mxu0 %v705
    %728 = vmatprep.subr.bf16.mxu0 0
    %729 = vmatpush2.bf16.msra.mxu0 0
    %730 = vmatprep.subr.bf16.mxu0 0
    %731 = vmatpush2.bf16.msra.mxu0 0
    %732 = vmatprep.subr.bf16.mxu0 0
    %733 = vmatpush2.bf16.msra.mxu0 0
    %734 = vmatprep.subr.bf16.mxu0 0
    %735 = vmatpush2.bf16.msra.mxu0 0
    %736 = vmatprep.subr.bf16.mxu0 0
    %737 = vmatpush2.bf16.msra.mxu0 0
    %738 = vmatprep.subr.bf16.mxu0 0
    %739 = vmatpush2.bf16.msra.mxu0 0
    %740 = vmatprep.subr.bf16.mxu0 0
    %741 = vmatpush2.bf16.msra.mxu0 0
    %742 = vmatprep.subr.bf16.mxu0 0
    %743 = vmatpush2.bf16.msra.mxu0 0
    %744 = vmatprep.mubr.bf16.mxu0 0
    %745 = vmatmul.mubr.bf16.gmra.mxu0 %v710
    %v746 = vpop.f32.mrf.mxu0
    %v747 = vadd.f32 %v696, %v746
    %v748 = vpop.f32.mrf.mxu0
    %v749 = vpop.f32.mrf.mxu0
    %v750 = vadd.f32 %v696, %v749
    %v751 = vpop.f32.mrf.mxu0
    %752 = vdwg.mxu0
    %v753 = vadd.f32 %v747, %v109
    %v754 = vadd.f32 %v750, %v110
    %v755 = vsel %vm71, %v753, 0.0
    %756 = vadd.xlane.f32.xlu0 %v755
    %v757 = vpop.xlane.xlu0 %756
    %v758 = vsel %vm71, %v754, 0.0
    %759 = vadd.xlane.f32.xlu0 %v758
    %v760 = vpop.xlane.xlu0 %759
    %v761 = vmul.f32 %v757, %v78
    %v762 = vmul.f32 %v760, %v78
    %v763 = vsub.f32 %v753, %v761
    %v764 = vsub.f32 %v754, %v762
    %v765 = vmul.f32 %v763, %v763
    %v766 = vmul.f32 %v764, %v764
    %v767 = vsel %vm71, %v765, 0.0
    %768 = vadd.xlane.f32.xlu0 %v767
    %v769 = vpop.xlane.xlu0 %768
    %v770 = vsel %vm71, %v766, 0.0
    %771 = vadd.xlane.f32.xlu0 %v770
    %v772 = vpop.xlane.xlu0 %771
    %v773 = vmul.f32 %v769, %v78
    %v774 = vmul.f32 %v772, %v78
    %v775 = vadd.f32 %v773, 1e-12
    %v776 = vadd.f32 %v774, 1e-12
    %v777 = vrsqrt.pop %v775
    %v778 = vrsqrt.pop %v776
    %v779 = vmul.f32 %v763, %v777
    %v780 = vmul.f32 %v764, %v778
    %v781 = vlaneseq
    %v782 = vshrl.u32 %v781, 7
    %v783 = vsub.s32 0, %v782
    %v784 = vrot.slane %v114, %v783
    %v785 = vmul.f32 %v779, %v784
    %v786 = vmul.f32 %v780, %v784
    %v787 = vlaneseq
    %v788 = vshrl.u32 %v787, 7
    %v789 = vsub.s32 0, %v788
    %v790 = vrot.slane %v115, %v789
    %v791 = vadd.f32 %v785, %v790
    %v792 = vadd.f32 %v786, %v790
    %v793 = vpack.c.bf16 %v792, %v791
    %v794 = vlaneseq
    %v795 = vshrl.u32 %v794, 7
    %v796 = vsub.s32 0, %v795
    %v797 = vrot.slane %v112, %v796
    %v802 = vunpack.c.l.b16 %v127
    %v803 = vunpack.c.l.b16 %v128
    %v804 = vunpack.c.l.b16 %v129
    %v805 = vunpack.c.l.b16 %v130
    %v806 = vpack.c.b16 %v803, %v802
    %v807 = vpack.c.b16 %v805, %v804
    %v811 = vsel %vm71, %v793, 0
    %813 = vmatprep.subr.bf16.mxu0 0
    %814 = vmatpush1.bf16.msra.mxu0 0
    %815 = vmatprep.subr.bf16.mxu0 0
    %816 = vmatpush1.bf16.msra.mxu0 0
    %817 = vmatprep.subr.bf16.mxu0 0
    %818 = vmatpush1.bf16.msra.mxu0 0
    %819 = vmatprep.subr.bf16.mxu0 0
    %820 = vmatpush1.bf16.msra.mxu0 0
    %821 = vmatprep.subr.bf16.mxu0 0
    %822 = vmatpush1.bf16.msra.mxu0 0
    %823 = vmatprep.subr.bf16.mxu0 0
    %824 = vmatpush1.bf16.msra.mxu0 0
    %825 = vmatprep.subr.bf16.mxu0 0
    %826 = vmatpush1.bf16.msra.mxu0 %v807
    %827 = vmatprep.subr.bf16.mxu0 0
    %828 = vmatpush1.bf16.msra.mxu0 %v806
    %829 = vmatprep.subr.bf16.mxu0 0
    %830 = vmatpush2.bf16.msra.mxu0 0
    %831 = vmatprep.subr.bf16.mxu0 0
    %832 = vmatpush2.bf16.msra.mxu0 0
    %833 = vmatprep.subr.bf16.mxu0 0
    %834 = vmatpush2.bf16.msra.mxu0 0
    %835 = vmatprep.subr.bf16.mxu0 0
    %836 = vmatpush2.bf16.msra.mxu0 0
    %837 = vmatprep.subr.bf16.mxu0 0
    %838 = vmatpush2.bf16.msra.mxu0 0
    %839 = vmatprep.subr.bf16.mxu0 0
    %840 = vmatpush2.bf16.msra.mxu0 0
    %841 = vmatprep.subr.bf16.mxu0 0
    %842 = vmatpush2.bf16.msra.mxu0 0
    %843 = vmatprep.subr.bf16.mxu0 0
    %844 = vmatpush2.bf16.msra.mxu0 0
    %845 = vmatprep.mubr.bf16.mxu0 0
    %846 = vmatmul.mubr.bf16.gmra.mxu0 %v811
    %v847 = vpop.f32.mrf.mxu0
    %v848 = vadd.f32 %v797, %v847
    %v849 = vpop.f32.mrf.mxu0
    %v850 = vpop.f32.mrf.mxu0
    %v851 = vadd.f32 %v797, %v850
    %v852 = vpop.f32.mrf.mxu0
    %853 = vdwg.mxu0
    %v854 = vmul.f32 %v848, 0.5
    %v855 = vmul.f32 %v851, 0.5
    %v856 = vmul.f32 %v848, 0.70710677
    %v857 = vmul.f32 %v851, 0.70710677
    %v858 = verf.f32.pop %v856
    %v859 = verf.f32.pop %v857
    %v860 = vadd.f32 %v858, 1.0
    %v861 = vadd.f32 %v859, 1.0
    %v862 = vmul.f32 %v854, %v860
    %v863 = vmul.f32 %v855, %v861
    %v864 = vpack.c.bf16 %v863, %v862
    %v865 = vlaneseq
    %v866 = vshrl.u32 %v865, 7
    %v867 = vsub.s32 0, %v866
    %v868 = vrot.slane %v116, %v867
    %v885 = vunpack.c.l.b16 %v131
    %v886 = vunpack.c.l.b16 %v132
    %v887 = vunpack.c.l.b16 %v133
    %v888 = vunpack.c.l.b16 %v134
    %v889 = vunpack.c.l.b16 %v135
    %v890 = vunpack.c.l.b16 %v136
    %v891 = vunpack.c.l.b16 %v137
    %v892 = vunpack.c.l.b16 %v138
    %v893 = vunpack.c.l.b16 %v139
    %v894 = vunpack.c.l.b16 %v140
    %v895 = vunpack.c.l.b16 %v141
    %v896 = vunpack.c.l.b16 %v142
    %v897 = vunpack.c.l.b16 %v143
    %v898 = vunpack.c.l.b16 %v144
    %v899 = vunpack.c.l.b16 %v145
    %v900 = vunpack.c.l.b16 %v146
    %v901 = vpack.c.b16 %v886, %v885
    %v902 = vpack.c.b16 %v888, %v887
    %v903 = vpack.c.b16 %v890, %v889
    %v904 = vpack.c.b16 %v892, %v891
    %v905 = vpack.c.b16 %v894, %v893
    %v906 = vpack.c.b16 %v896, %v895
    %v907 = vpack.c.b16 %v898, %v897
    %v908 = vpack.c.b16 %v900, %v899
    %917 = vmatprep.subr.bf16.mxu0 0
    %918 = vmatpush1.bf16.msra.mxu0 %v908
    %919 = vmatprep.subr.bf16.mxu0 0
    %920 = vmatpush1.bf16.msra.mxu0 %v907
    %921 = vmatprep.subr.bf16.mxu0 0
    %922 = vmatpush1.bf16.msra.mxu0 %v906
    %923 = vmatprep.subr.bf16.mxu0 0
    %924 = vmatpush1.bf16.msra.mxu0 %v905
    %925 = vmatprep.subr.bf16.mxu0 0
    %926 = vmatpush1.bf16.msra.mxu0 %v904
    %927 = vmatprep.subr.bf16.mxu0 0
    %928 = vmatpush1.bf16.msra.mxu0 %v903
    %929 = vmatprep.subr.bf16.mxu0 0
    %930 = vmatpush1.bf16.msra.mxu0 %v902
    %931 = vmatprep.subr.bf16.mxu0 0
    %932 = vmatpush1.bf16.msra.mxu0 %v901
    %933 = vmatprep.subr.bf16.mxu0 0
    %934 = vmatpush2.bf16.msra.mxu0 0
    %935 = vmatprep.subr.bf16.mxu0 0
    %936 = vmatpush2.bf16.msra.mxu0 0
    %937 = vmatprep.subr.bf16.mxu0 0
    %938 = vmatpush2.bf16.msra.mxu0 0
    %939 = vmatprep.subr.bf16.mxu0 0
    %940 = vmatpush2.bf16.msra.mxu0 0
    %941 = vmatprep.subr.bf16.mxu0 0
    %942 = vmatpush2.bf16.msra.mxu0 0
    %943 = vmatprep.subr.bf16.mxu0 0
    %944 = vmatpush2.bf16.msra.mxu0 0
    %945 = vmatprep.subr.bf16.mxu0 0
    %946 = vmatpush2.bf16.msra.mxu0 0
    %947 = vmatprep.subr.bf16.mxu0 0
    %948 = vmatpush2.bf16.msra.mxu0 0
    %949 = vmatprep.mubr.bf16.mxu0 0
    %950 = vmatmul.mubr.bf16.gmra.mxu0 %v864
    %v951 = vpop.f32.mrf.mxu0
    %v952 = vadd.f32 %v868, %v951
    %v953 = vpop.f32.mrf.mxu0
    %v954 = vpop.f32.mrf.mxu0
    %v955 = vadd.f32 %v868, %v954
    %v956 = vpop.f32.mrf.mxu0
    %957 = vdwg.mxu0
    %v958 = vadd.f32 %v952, %v791
    %v959 = vadd.f32 %v955, %v792
    %v960 = vsel %vm71, %v958, 0.0
    %961 = vadd.xlane.f32.xlu0 %v960
    %v962 = vpop.xlane.xlu0 %961
    %v963 = vsel %vm71, %v959, 0.0
    %964 = vadd.xlane.f32.xlu0 %v963
    %v965 = vpop.xlane.xlu0 %964
    %v966 = vmul.f32 %v962, %v78
    %v967 = vmul.f32 %v965, %v78
    %v968 = vsub.f32 %v958, %v966
    %v969 = vsub.f32 %v959, %v967
    %v970 = vmul.f32 %v968, %v968
    %v971 = vmul.f32 %v969, %v969
    %v972 = vsel %vm71, %v970, 0.0
    %973 = vadd.xlane.f32.xlu0 %v972
    %v974 = vpop.xlane.xlu0 %973
    %v975 = vsel %vm71, %v971, 0.0
    %976 = vadd.xlane.f32.xlu0 %v975
    %v977 = vpop.xlane.xlu0 %976
    %v978 = vmul.f32 %v974, %v78
    %v979 = vmul.f32 %v977, %v78
    %v980 = vadd.f32 %v978, 1e-12
    %v981 = vadd.f32 %v979, 1e-12
    %v982 = vrsqrt.pop %v980
    %v983 = vrsqrt.pop %v981
    %v984 = vmul.f32 %v968, %v982
    %v985 = vmul.f32 %v969, %v983
    %v986 = vlaneseq
    %v987 = vshrl.u32 %v986, 7
    %v988 = vsub.s32 0, %v987
    %v989 = vrot.slane %v117, %v988
    %v990 = vmul.f32 %v984, %v989
    %v991 = vmul.f32 %v985, %v989
    %v992 = vlaneseq
    %v993 = vshrl.u32 %v992, 7
    %v994 = vsub.s32 0, %v993
    %v995 = vrot.slane %v118, %v994
    %v996 = vadd.f32 %v990, %v995
    %v997 = vadd.f32 %v991, %v995
    %v998 = vld [vmem:[%s11 + $0x1] sm:$0x1]
    %v999 = vld [vmem:[%s11 + $0x3] sm:$0x1]
    %v1000 = vld [vmem:[%s10 + $0x8] sm:$0x1]
    %v1001 = vld [vmem:[%s10 + $0x9] sm:$0x1]
    %v1002 = vld [vmem:[%s10 + $0xa] sm:$0x1]
    %v1003 = vld [vmem:[%s10 + $0xb] sm:$0x1]
    %v1004 = vld [vmem:[%s10 + $0xc] sm:$0x1]
    %v1005 = vld [vmem:[%s10 + $0xd] sm:$0x1]
    %s1006 = scalar_lea.vmem %s5, 16
    %v1007 = vld [vmem:[%s1006] sm:$0xf]
    %v1008 = vld [vmem:[%s1006 + $0x4] sm:$0xf]
    %v1009 = vld [vmem:[%s1006 + $0x8] sm:$0xf]
    %v1010 = vld [vmem:[%s1006 + $0xc] sm:$0xf]
    %s1011 = scalar_lea.vmem %s6, 16
    %v1012 = vld [vmem:[%s1011] sm:$0xf]
    %v1013 = vld [vmem:[%s1011 + $0x4] sm:$0xf]
    %v1014 = vld [vmem:[%s1011 + $0x8] sm:$0xf]
    %v1015 = vld [vmem:[%s1011 + $0xc] sm:$0xf]
    %s1016 = scalar_lea.vmem %s7, 16
    %v1017 = vld [vmem:[%s1016] sm:$0xf]
    %v1018 = vld [vmem:[%s1016 + $0x4] sm:$0xf]
    %v1019 = vld [vmem:[%s1016 + $0x8] sm:$0xf]
    %v1020 = vld [vmem:[%s1016 + $0xc] sm:$0xf]
    %s1021 = scalar_lea.vmem %s8, 64
    %v1022 = vld [vmem:[%s1021] sm:$0xf]
    %v1023 = vld [vmem:[%s1021 + $0x4] sm:$0xf]
    %v1024 = vld [vmem:[%s1021 + $0x8] sm:$0xf]
    %v1025 = vld [vmem:[%s1021 + $0xc] sm:$0xf]
    %v1026 = vld [vmem:[%s1021 + $0x10] sm:$0xf]
    %v1027 = vld [vmem:[%s1021 + $0x14] sm:$0xf]
    %v1028 = vld [vmem:[%s1021 + $0x18] sm:$0xf]
    %v1029 = vld [vmem:[%s1021 + $0x1c] sm:$0xf]
    %v1030 = vld [vmem:[%s1021 + $0x20] sm:$0xf]
    %v1031 = vld [vmem:[%s1021 + $0x24] sm:$0xf]
    %v1032 = vld [vmem:[%s1021 + $0x28] sm:$0xf]
    %v1033 = vld [vmem:[%s1021 + $0x2c] sm:$0xf]
    %v1034 = vld [vmem:[%s1021 + $0x30] sm:$0xf]
    %v1035 = vld [vmem:[%s1021 + $0x34] sm:$0xf]
    %v1036 = vld [vmem:[%s1021 + $0x38] sm:$0xf]
    %v1037 = vld [vmem:[%s1021 + $0x3c] sm:$0xf]
    %v1038 = vpack.c.bf16 %v997, %v996
    %v1039 = vlaneseq
    %v1040 = vshrl.u32 %v1039, 7
    %v1041 = vsub.s32 0, %v1040
    %v1042 = vrot.slane %v998, %v1041
    %v1047 = vunpack.c.l.b16 %v1007
    %v1048 = vunpack.c.l.b16 %v1008
    %v1049 = vunpack.c.l.b16 %v1009
    %v1050 = vunpack.c.l.b16 %v1010
    %v1051 = vpack.c.b16 %v1048, %v1047
    %v1052 = vpack.c.b16 %v1050, %v1049
    %v1056 = vsel %vm71, %v1038, 0
    %1058 = vmatprep.subr.bf16.mxu0 0
    %1059 = vmatpush1.bf16.msra.mxu0 0
    %1060 = vmatprep.subr.bf16.mxu0 0
    %1061 = vmatpush1.bf16.msra.mxu0 0
    %1062 = vmatprep.subr.bf16.mxu0 0
    %1063 = vmatpush1.bf16.msra.mxu0 0
    %1064 = vmatprep.subr.bf16.mxu0 0
    %1065 = vmatpush1.bf16.msra.mxu0 0
    %1066 = vmatprep.subr.bf16.mxu0 0
    %1067 = vmatpush1.bf16.msra.mxu0 0
    %1068 = vmatprep.subr.bf16.mxu0 0
    %1069 = vmatpush1.bf16.msra.mxu0 0
    %1070 = vmatprep.subr.bf16.mxu0 0
    %1071 = vmatpush1.bf16.msra.mxu0 %v1052
    %1072 = vmatprep.subr.bf16.mxu0 0
    %1073 = vmatpush1.bf16.msra.mxu0 %v1051
    %1074 = vmatprep.subr.bf16.mxu0 0
    %1075 = vmatpush2.bf16.msra.mxu0 0
    %1076 = vmatprep.subr.bf16.mxu0 0
    %1077 = vmatpush2.bf16.msra.mxu0 0
    %1078 = vmatprep.subr.bf16.mxu0 0
    %1079 = vmatpush2.bf16.msra.mxu0 0
    %1080 = vmatprep.subr.bf16.mxu0 0
    %1081 = vmatpush2.bf16.msra.mxu0 0
    %1082 = vmatprep.subr.bf16.mxu0 0
    %1083 = vmatpush2.bf16.msra.mxu0 0
    %1084 = vmatprep.subr.bf16.mxu0 0
    %1085 = vmatpush2.bf16.msra.mxu0 0
    %1086 = vmatprep.subr.bf16.mxu0 0
    %1087 = vmatpush2.bf16.msra.mxu0 0
    %1088 = vmatprep.subr.bf16.mxu0 0
    %1089 = vmatpush2.bf16.msra.mxu0 0
    %1090 = vmatprep.mubr.bf16.mxu0 0
    %1091 = vmatmul.mubr.bf16.gmra.mxu0 %v1056
    %v1092 = vpop.f32.mrf.mxu0
    %v1093 = vadd.f32 %v1042, %v1092
    %v1094 = vpop.f32.mrf.mxu0
    %v1095 = vpop.f32.mrf.mxu0
    %v1096 = vadd.f32 %v1042, %v1095
    %v1097 = vpop.f32.mrf.mxu0
    %1098 = vdwg.mxu0
    %v1099 = vpack.c.bf16 %v1096, %v1093
    %1100 = vmatprep.subr.bf16.mxu0 0
    %1101 = vmatpush1.bf16.msra.mxu0 0
    %1102 = vmatprep.subr.bf16.mxu0 0
    %1103 = vmatpush1.bf16.msra.mxu0 0
    %1104 = vmatprep.subr.bf16.mxu0 0
    %1105 = vmatpush1.bf16.msra.mxu0 0
    %1106 = vmatprep.subr.bf16.mxu0 0
    %1107 = vmatpush1.bf16.msra.mxu0 0
    %1108 = vmatprep.subr.bf16.mxu0 0
    %1109 = vmatpush1.bf16.msra.mxu0 0
    %1110 = vmatprep.subr.bf16.mxu0 0
    %1111 = vmatpush1.bf16.msra.mxu0 0
    %1112 = vmatprep.subr.bf16.mxu0 0
    %1113 = vmatpush1.bf16.msra.mxu0 0
    %1114 = vmatprep.subr.bf16.mxu0 0
    %1115 = vmatpush1.bf16.msra.mxu0 %v1099
    %1116 = vmatprep.subr.bf16.mxu0 0
    %1117 = vmatpush2.bf16.msra.mxu0 0
    %1118 = vmatprep.subr.bf16.mxu0 0
    %1119 = vmatpush2.bf16.msra.mxu0 0
    %1120 = vmatprep.subr.bf16.mxu0 0
    %1121 = vmatpush2.bf16.msra.mxu0 0
    %1122 = vmatprep.subr.bf16.mxu0 0
    %1123 = vmatpush2.bf16.msra.mxu0 0
    %1124 = vmatprep.subr.bf16.mxu0 0
    %1125 = vmatpush2.bf16.msra.mxu0 0
    %1126 = vmatprep.subr.bf16.mxu0 0
    %1127 = vmatpush2.bf16.msra.mxu0 0
    %1128 = vmatprep.subr.bf16.mxu0 0
    %1129 = vmatpush2.bf16.msra.mxu0 0
    %1130 = vmatprep.subr.bf16.mxu0 0
    %1131 = vmatpush2.bf16.msra.mxu0 0
    %1132 = vmatprep.mubr.bf16.mxu0 0
    %1133 = vmatmul.mubr.bf16.gmra.mxu0 %v231
    %v1134 = vpop.f32.mrf.mxu0
    %v1135 = vadd.f32 0.0, %v1134
    %v1136 = vpop.f32.mrf.mxu0
    %v1137 = vpop.f32.mrf.mxu0
    %v1138 = vadd.f32 0.0, %v1137
    %v1139 = vpop.f32.mrf.mxu0
    %1140 = vmatprep.mubr.bf16.mxu0 0
    %1141 = vmatmul.mubr.bf16.gmra.mxu0 %v234
    %v1142 = vpop.f32.mrf.mxu0
    %v1143 = vadd.f32 0.0, %v1142
    %v1144 = vpop.f32.mrf.mxu0
    %v1145 = vpop.f32.mrf.mxu0
    %v1146 = vadd.f32 0.0, %v1145
    %v1147 = vpop.f32.mrf.mxu0
    %1148 = vmatprep.mubr.bf16.mxu0 0
    %1149 = vmatmul.mubr.bf16.gmra.mxu0 %v237
    %v1150 = vpop.f32.mrf.mxu0
    %v1151 = vadd.f32 0.0, %v1150
    %v1152 = vpop.f32.mrf.mxu0
    %v1153 = vpop.f32.mrf.mxu0
    %v1154 = vadd.f32 0.0, %v1153
    %v1155 = vpop.f32.mrf.mxu0
    %1156 = vmatprep.mubr.bf16.mxu0 0
    %1157 = vmatmul.mubr.bf16.gmra.mxu0 %v240
    %v1158 = vpop.f32.mrf.mxu0
    %v1159 = vadd.f32 0.0, %v1158
    %v1160 = vpop.f32.mrf.mxu0
    %v1161 = vpop.f32.mrf.mxu0
    %v1162 = vadd.f32 0.0, %v1161
    %v1163 = vpop.f32.mrf.mxu0
    %1164 = vdwg.mxu0
    %v1165 = vmul.f32 %v1135, 0.35355338
    %v1166 = vmul.f32 %v1138, 0.35355338
    %v1167 = vmul.f32 %v1143, 0.35355338
    %v1168 = vmul.f32 %v1146, 0.35355338
    %v1169 = vmul.f32 %v1151, 0.35355338
    %v1170 = vmul.f32 %v1154, 0.35355338
    %v1171 = vmul.f32 %v1159, 0.35355338
    %v1172 = vmul.f32 %v1162, 0.35355338
    %v1173 = vmul.f32 %v1135, %v324
    %v1174 = vmul.f32 %v1138, %v326
    %v1175 = vmul.f32 %v1143, %v328
    %v1176 = vmul.f32 %v1146, %v330
    %v1177 = vmul.f32 %v1151, %v332
    %v1178 = vmul.f32 %v1154, %v334
    %v1179 = vmul.f32 %v1159, %v336
    %v1180 = vmul.f32 %v1162, %v338
    %v1181 = vmul.f32 %v1135, %v356
    %v1182 = vmul.f32 %v1138, %v358
    %v1183 = vmul.f32 %v1143, %v360
    %v1184 = vmul.f32 %v1146, %v362
    %v1185 = vmul.f32 %v1151, %v364
    %v1186 = vmul.f32 %v1154, %v366
    %v1187 = vmul.f32 %v1159, %v368
    %v1188 = vmul.f32 %v1162, %v370
    %v1189 = vpack.c.bf16 %v1166, %v1165
    %v1190 = vpack.c.bf16 %v1168, %v1167
    %v1191 = vpack.c.bf16 %v1170, %v1169
    %v1192 = vpack.c.bf16 %v1172, %v1171
    %v1193 = vpack.c.bf16 %v1174, %v1173
    %v1194 = vpack.c.bf16 %v1176, %v1175
    %v1195 = vpack.c.bf16 %v1178, %v1177
    %v1196 = vpack.c.bf16 %v1180, %v1179
    %1201 = vrot.lane.b32.xlu0 %v1193, 96
    %v1202 = vpop.permute.xlu0 %1201
    %1203 = vrot.lane.b32.xlu0 %v1194, 96
    %v1204 = vpop.permute.xlu0 %1203
    %1205 = vrot.lane.b32.xlu0 %v1195, 96
    %v1206 = vpop.permute.xlu0 %1205
    %1207 = vrot.lane.b32.xlu0 %v1196, 96
    %v1208 = vpop.permute.xlu0 %1207
    %v1210 = vsel %vm71, %v1189, 0
    %v1213 = vsel %vm71, %v1190, 0
    %v1216 = vsel %vm71, %v1191, 0
    %v1219 = vsel %vm71, %v1192, 0
    %v1222 = vsel %vm71, %v1202, 0
    %v1225 = vsel %vm71, %v1204, 0
    %v1228 = vsel %vm71, %v1206, 0
    %v1231 = vsel %vm71, %v1208, 0
    %1233 = vmatprep.subr.bf16.mxu0 0
    %1234 = vmatpush1.bf16.xpose.msra.mxu0 0
    %1235 = vmatprep.subr.bf16.mxu0 0
    %1236 = vmatpush1.bf16.xpose.msra.mxu0 0
    %1237 = vmatprep.subr.bf16.mxu0 0
    %1238 = vmatpush1.bf16.xpose.msra.mxu0 0
    %1239 = vmatprep.subr.bf16.mxu0 0
    %1240 = vmatpush1.bf16.xpose.msra.mxu0 0
    %1241 = vmatprep.subr.bf16.mxu0 0
    %1242 = vmatpush1.bf16.xpose.msra.mxu0 %v1231
    %1243 = vmatprep.subr.bf16.mxu0 0
    %1244 = vmatpush1.bf16.xpose.msra.mxu0 %v1228
    %1245 = vmatprep.subr.bf16.mxu0 0
    %1246 = vmatpush1.bf16.xpose.msra.mxu0 %v1225
    %1247 = vmatprep.subr.bf16.mxu0 0
    %1248 = vmatpush1.bf16.xpose.msra.mxu0 %v1222
    %1249 = vmatprep.subr.bf16.mxu0 0
    %1250 = vmatpush2.bf16.xpose.msra.mxu0 0
    %1251 = vmatprep.subr.bf16.mxu0 0
    %1252 = vmatpush2.bf16.xpose.msra.mxu0 0
    %1253 = vmatprep.subr.bf16.mxu0 0
    %1254 = vmatpush2.bf16.xpose.msra.mxu0 0
    %1255 = vmatprep.subr.bf16.mxu0 0
    %1256 = vmatpush2.bf16.xpose.msra.mxu0 0
    %1257 = vmatprep.subr.bf16.mxu0 0
    %1258 = vmatpush2.bf16.xpose.msra.mxu0 0
    %1259 = vmatprep.subr.bf16.mxu0 0
    %1260 = vmatpush2.bf16.xpose.msra.mxu0 0
    %1261 = vmatprep.subr.bf16.mxu0 0
    %1262 = vmatpush2.bf16.xpose.msra.mxu0 0
    %1263 = vmatprep.subr.bf16.mxu0 0
    %1264 = vmatpush2.bf16.xpose.msra.mxu0 0
    %1265 = vmatprep.mubr.bf16.mxu0 0
    %1266 = vmatmul.mubr.bf16.gmra.mxu0 %v1210
    %v1267 = vpop.f32.mrf.mxu0
    %v1268 = vadd.f32 %v43, %v1267
    %v1269 = vpop.f32.mrf.mxu0
    %v1270 = vpop.f32.mrf.mxu0
    %v1271 = vadd.f32 %v44, %v1270
    %v1272 = vpop.f32.mrf.mxu0
    %1273 = vmatprep.mubr.bf16.mxu0 0
    %1274 = vmatmul.mubr.bf16.gmra.mxu0 %v1213
    %v1275 = vpop.f32.mrf.mxu0
    %v1276 = vadd.f32 %v45, %v1275
    %v1277 = vpop.f32.mrf.mxu0
    %v1278 = vpop.f32.mrf.mxu0
    %v1279 = vadd.f32 %v46, %v1278
    %v1280 = vpop.f32.mrf.mxu0
    %1281 = vmatprep.mubr.bf16.mxu0 0
    %1282 = vmatmul.mubr.bf16.gmra.mxu0 %v1216
    %v1283 = vpop.f32.mrf.mxu0
    %v1284 = vadd.f32 %v47, %v1283
    %v1285 = vpop.f32.mrf.mxu0
    %v1286 = vpop.f32.mrf.mxu0
    %v1287 = vadd.f32 %v48, %v1286
    %v1288 = vpop.f32.mrf.mxu0
    %1289 = vmatprep.mubr.bf16.mxu0 0
    %1290 = vmatmul.mubr.bf16.gmra.mxu0 %v1219
    %v1291 = vpop.f32.mrf.mxu0
    %v1292 = vadd.f32 %v49, %v1291
    %v1293 = vpop.f32.mrf.mxu0
    %v1294 = vpop.f32.mrf.mxu0
    %v1295 = vadd.f32 %v50, %v1294
    %v1296 = vpop.f32.mrf.mxu0
    %1297 = vdwg.mxu0
    %v1298 = vsel %vm496, %v1268, -inf
    %1299 = vmax.xlane.f32.xlu0 %v1298
    %v1300 = vpop.xlane.xlu0 %1299
    %v1301 = vsel %vm496, %v1271, -inf
    %1302 = vmax.xlane.f32.xlu0 %v1301
    %v1303 = vpop.xlane.xlu0 %1302
    %v1304 = vsel %vm496, %v1276, -inf
    %1305 = vmax.xlane.f32.xlu0 %v1304
    %v1306 = vpop.xlane.xlu0 %1305
    %v1307 = vsel %vm496, %v1279, -inf
    %1308 = vmax.xlane.f32.xlu0 %v1307
    %v1309 = vpop.xlane.xlu0 %1308
    %v1310 = vsel %vm496, %v1284, -inf
    %1311 = vmax.xlane.f32.xlu0 %v1310
    %v1312 = vpop.xlane.xlu0 %1311
    %v1313 = vsel %vm496, %v1287, -inf
    %1314 = vmax.xlane.f32.xlu0 %v1313
    %v1315 = vpop.xlane.xlu0 %1314
    %v1316 = vsel %vm496, %v1292, -inf
    %1317 = vmax.xlane.f32.xlu0 %v1316
    %v1318 = vpop.xlane.xlu0 %1317
    %v1319 = vsel %vm496, %v1295, -inf
    %1320 = vmax.xlane.f32.xlu0 %v1319
    %v1321 = vpop.xlane.xlu0 %1320
    %v1322 = vsub.f32 %v1268, %v1300
    %v1323 = vsub.f32 %v1271, %v1303
    %v1324 = vsub.f32 %v1276, %v1306
    %v1325 = vsub.f32 %v1279, %v1309
    %v1326 = vsub.f32 %v1284, %v1312
    %v1327 = vsub.f32 %v1287, %v1315
    %v1328 = vsub.f32 %v1292, %v1318
    %v1329 = vsub.f32 %v1295, %v1321
    %v1330 = vmul.f32 %v1322, 1.442695
    %v1331 = vpow.pop %v1330
    %v1332 = vmul.f32 %v1323, 1.442695
    %v1333 = vpow.pop %v1332
    %v1334 = vmul.f32 %v1324, 1.442695
    %v1335 = vpow.pop %v1334
    %v1336 = vmul.f32 %v1325, 1.442695
    %v1337 = vpow.pop %v1336
    %v1338 = vmul.f32 %v1326, 1.442695
    %v1339 = vpow.pop %v1338
    %v1340 = vmul.f32 %v1327, 1.442695
    %v1341 = vpow.pop %v1340
    %v1342 = vmul.f32 %v1328, 1.442695
    %v1343 = vpow.pop %v1342
    %v1344 = vmul.f32 %v1329, 1.442695
    %v1345 = vpow.pop %v1344
    %v1346 = vsel %vm496, %v1331, 0.0
    %1347 = vadd.xlane.f32.xlu0 %v1346
    %v1348 = vpop.xlane.xlu0 %1347
    %v1349 = vsel %vm496, %v1333, 0.0
    %1350 = vadd.xlane.f32.xlu0 %v1349
    %v1351 = vpop.xlane.xlu0 %1350
    %v1352 = vsel %vm496, %v1335, 0.0
    %1353 = vadd.xlane.f32.xlu0 %v1352
    %v1354 = vpop.xlane.xlu0 %1353
    %v1355 = vsel %vm496, %v1337, 0.0
    %1356 = vadd.xlane.f32.xlu0 %v1355
    %v1357 = vpop.xlane.xlu0 %1356
    %v1358 = vsel %vm496, %v1339, 0.0
    %1359 = vadd.xlane.f32.xlu0 %v1358
    %v1360 = vpop.xlane.xlu0 %1359
    %v1361 = vsel %vm496, %v1341, 0.0
    %1362 = vadd.xlane.f32.xlu0 %v1361
    %v1363 = vpop.xlane.xlu0 %1362
    %v1364 = vsel %vm496, %v1343, 0.0
    %1365 = vadd.xlane.f32.xlu0 %v1364
    %v1366 = vpop.xlane.xlu0 %1365
    %v1367 = vsel %vm496, %v1345, 0.0
    %1368 = vadd.xlane.f32.xlu0 %v1367
    %v1369 = vpop.xlane.xlu0 %1368
    %v1370 = vrcp.pop %v1348
    %v1371 = vrcp.pop %v1351
    %v1372 = vrcp.pop %v1354
    %v1373 = vrcp.pop %v1357
    %v1374 = vrcp.pop %v1360
    %v1375 = vrcp.pop %v1363
    %v1376 = vrcp.pop %v1366
    %v1377 = vrcp.pop %v1369
    %v1378 = vmul.f32 %v1331, %v1370
    %v1379 = vmul.f32 %v1333, %v1371
    %v1380 = vmul.f32 %v1335, %v1372
    %v1381 = vmul.f32 %v1337, %v1373
    %v1382 = vmul.f32 %v1339, %v1374
    %v1383 = vmul.f32 %v1341, %v1375
    %v1384 = vmul.f32 %v1343, %v1376
    %v1385 = vmul.f32 %v1345, %v1377
    %v1386 = vpack.c.bf16 %v1379, %v1378
    %v1387 = vpack.c.bf16 %v1381, %v1380
    %v1388 = vpack.c.bf16 %v1383, %v1382
    %v1389 = vpack.c.bf16 %v1385, %v1384
    %v1390 = vpack.c.bf16 %v1182, %v1181
    %v1391 = vpack.c.bf16 %v1184, %v1183
    %v1392 = vpack.c.bf16 %v1186, %v1185
    %v1393 = vpack.c.bf16 %v1188, %v1187
    %1398 = vrot.lane.b32.xlu0 %v1390, 64
    %v1399 = vpop.permute.xlu0 %1398
    %1400 = vrot.lane.b32.xlu0 %v1391, 64
    %v1401 = vpop.permute.xlu0 %1400
    %1402 = vrot.lane.b32.xlu0 %v1392, 64
    %v1403 = vpop.permute.xlu0 %1402
    %1404 = vrot.lane.b32.xlu0 %v1393, 64
    %v1405 = vpop.permute.xlu0 %1404
    %v1411 = vsel %vm496, %v1386, 0
    %v1414 = vsel %vm496, %v1387, 0
    %v1417 = vsel %vm496, %v1388, 0
    %v1420 = vsel %vm496, %v1389, 0
    %1422 = vmatprep.subr.bf16.mxu0 0
    %1423 = vmatpush1.bf16.msra.mxu0 0
    %1424 = vmatprep.subr.bf16.mxu0 0
    %1425 = vmatpush1.bf16.msra.mxu0 0
    %1426 = vmatprep.subr.bf16.mxu0 0
    %1427 = vmatpush1.bf16.msra.mxu0 0
    %1428 = vmatprep.subr.bf16.mxu0 0
    %1429 = vmatpush1.bf16.msra.mxu0 0
    %1430 = vmatprep.subr.bf16.mxu0 0
    %1431 = vmatpush1.bf16.msra.mxu0 %v1405
    %1432 = vmatprep.subr.bf16.mxu0 0
    %1433 = vmatpush1.bf16.msra.mxu0 %v1403
    %1434 = vmatprep.subr.bf16.mxu0 0
    %1435 = vmatpush1.bf16.msra.mxu0 %v1401
    %1436 = vmatprep.subr.bf16.mxu0 0
    %1437 = vmatpush1.bf16.msra.mxu0 %v1399
    %1438 = vmatprep.subr.bf16.mxu0 0
    %1439 = vmatpush2.bf16.msra.mxu0 0
    %1440 = vmatprep.subr.bf16.mxu0 0
    %1441 = vmatpush2.bf16.msra.mxu0 0
    %1442 = vmatprep.subr.bf16.mxu0 0
    %1443 = vmatpush2.bf16.msra.mxu0 0
    %1444 = vmatprep.subr.bf16.mxu0 0
    %1445 = vmatpush2.bf16.msra.mxu0 0
    %1446 = vmatprep.subr.bf16.mxu0 0
    %1447 = vmatpush2.bf16.msra.mxu0 0
    %1448 = vmatprep.subr.bf16.mxu0 0
    %1449 = vmatpush2.bf16.msra.mxu0 0
    %1450 = vmatprep.subr.bf16.mxu0 0
    %1451 = vmatpush2.bf16.msra.mxu0 0
    %1452 = vmatprep.subr.bf16.mxu0 0
    %1453 = vmatpush2.bf16.msra.mxu0 0
    %1454 = vmatprep.mubr.bf16.mxu0 0
    %1455 = vmatmul.mubr.bf16.gmra.mxu0 %v1411
    %v1456 = vpop.f32.mrf.mxu0
    %v1457 = vadd.f32 0.0, %v1456
    %v1458 = vpop.f32.mrf.mxu0
    %v1459 = vpop.f32.mrf.mxu0
    %v1460 = vadd.f32 0.0, %v1459
    %v1461 = vpop.f32.mrf.mxu0
    %1462 = vmatprep.mubr.bf16.mxu0 0
    %1463 = vmatmul.mubr.bf16.gmra.mxu0 %v1414
    %v1464 = vpop.f32.mrf.mxu0
    %v1465 = vadd.f32 0.0, %v1464
    %v1466 = vpop.f32.mrf.mxu0
    %v1467 = vpop.f32.mrf.mxu0
    %v1468 = vadd.f32 0.0, %v1467
    %v1469 = vpop.f32.mrf.mxu0
    %1470 = vmatprep.mubr.bf16.mxu0 0
    %1471 = vmatmul.mubr.bf16.gmra.mxu0 %v1417
    %v1472 = vpop.f32.mrf.mxu0
    %v1473 = vadd.f32 0.0, %v1472
    %v1474 = vpop.f32.mrf.mxu0
    %v1475 = vpop.f32.mrf.mxu0
    %v1476 = vadd.f32 0.0, %v1475
    %v1477 = vpop.f32.mrf.mxu0
    %1478 = vmatprep.mubr.bf16.mxu0 0
    %1479 = vmatmul.mubr.bf16.gmra.mxu0 %v1420
    %v1480 = vpop.f32.mrf.mxu0
    %v1481 = vadd.f32 0.0, %v1480
    %v1482 = vpop.f32.mrf.mxu0
    %v1483 = vpop.f32.mrf.mxu0
    %v1484 = vadd.f32 0.0, %v1483
    %v1485 = vpop.f32.mrf.mxu0
    %1486 = vdwg.mxu0
    %v1487 = vadd.f32 %v1457, %v1465
    %v1488 = vadd.f32 %v1460, %v1468
    %v1489 = vadd.f32 %v1487, %v1473
    %v1490 = vadd.f32 %v1488, %v1476
    %v1491 = vadd.f32 %v1489, %v1481
    %v1492 = vadd.f32 %v1490, %v1484
    %v1493 = vpack.c.bf16 %v1492, %v1491
    %v1494 = vlaneseq
    %v1495 = vshrl.u32 %v1494, 7
    %v1496 = vsub.s32 0, %v1495
    %v1497 = vrot.slane %v1000, %v1496
    %v1502 = vunpack.c.l.b16 %v1012
    %v1503 = vunpack.c.l.b16 %v1013
    %v1504 = vunpack.c.l.b16 %v1014
    %v1505 = vunpack.c.l.b16 %v1015
    %v1506 = vpack.c.b16 %v1503, %v1502
    %v1507 = vpack.c.b16 %v1505, %v1504
    %v1511 = vsel %vm71, %v1493, 0
    %1513 = vmatprep.subr.bf16.mxu0 0
    %1514 = vmatpush1.bf16.msra.mxu0 0
    %1515 = vmatprep.subr.bf16.mxu0 0
    %1516 = vmatpush1.bf16.msra.mxu0 0
    %1517 = vmatprep.subr.bf16.mxu0 0
    %1518 = vmatpush1.bf16.msra.mxu0 0
    %1519 = vmatprep.subr.bf16.mxu0 0
    %1520 = vmatpush1.bf16.msra.mxu0 0
    %1521 = vmatprep.subr.bf16.mxu0 0
    %1522 = vmatpush1.bf16.msra.mxu0 0
    %1523 = vmatprep.subr.bf16.mxu0 0
    %1524 = vmatpush1.bf16.msra.mxu0 0
    %1525 = vmatprep.subr.bf16.mxu0 0
    %1526 = vmatpush1.bf16.msra.mxu0 %v1507
    %1527 = vmatprep.subr.bf16.mxu0 0
    %1528 = vmatpush1.bf16.msra.mxu0 %v1506
    %1529 = vmatprep.subr.bf16.mxu0 0
    %1530 = vmatpush2.bf16.msra.mxu0 0
    %1531 = vmatprep.subr.bf16.mxu0 0
    %1532 = vmatpush2.bf16.msra.mxu0 0
    %1533 = vmatprep.subr.bf16.mxu0 0
    %1534 = vmatpush2.bf16.msra.mxu0 0
    %1535 = vmatprep.subr.bf16.mxu0 0
    %1536 = vmatpush2.bf16.msra.mxu0 0
    %1537 = vmatprep.subr.bf16.mxu0 0
    %1538 = vmatpush2.bf16.msra.mxu0 0
    %1539 = vmatprep.subr.bf16.mxu0 0
    %1540 = vmatpush2.bf16.msra.mxu0 0
    %1541 = vmatprep.subr.bf16.mxu0 0
    %1542 = vmatpush2.bf16.msra.mxu0 0
    %1543 = vmatprep.subr.bf16.mxu0 0
    %1544 = vmatpush2.bf16.msra.mxu0 0
    %1545 = vmatprep.mubr.bf16.mxu0 0
    %1546 = vmatmul.mubr.bf16.gmra.mxu0 %v1511
    %v1547 = vpop.f32.mrf.mxu0
    %v1548 = vadd.f32 %v1497, %v1547
    %v1549 = vpop.f32.mrf.mxu0
    %v1550 = vpop.f32.mrf.mxu0
    %v1551 = vadd.f32 %v1497, %v1550
    %v1552 = vpop.f32.mrf.mxu0
    %1553 = vdwg.mxu0
    %v1554 = vadd.f32 %v1548, %v996
    %v1555 = vadd.f32 %v1551, %v997
    %v1556 = vsel %vm71, %v1554, 0.0
    %1557 = vadd.xlane.f32.xlu0 %v1556
    %v1558 = vpop.xlane.xlu0 %1557
    %v1559 = vsel %vm71, %v1555, 0.0
    %1560 = vadd.xlane.f32.xlu0 %v1559
    %v1561 = vpop.xlane.xlu0 %1560
    %v1562 = vmul.f32 %v1558, %v78
    %v1563 = vmul.f32 %v1561, %v78
    %v1564 = vsub.f32 %v1554, %v1562
    %v1565 = vsub.f32 %v1555, %v1563
    %v1566 = vmul.f32 %v1564, %v1564
    %v1567 = vmul.f32 %v1565, %v1565
    %v1568 = vsel %vm71, %v1566, 0.0
    %1569 = vadd.xlane.f32.xlu0 %v1568
    %v1570 = vpop.xlane.xlu0 %1569
    %v1571 = vsel %vm71, %v1567, 0.0
    %1572 = vadd.xlane.f32.xlu0 %v1571
    %v1573 = vpop.xlane.xlu0 %1572
    %v1574 = vmul.f32 %v1570, %v78
    %v1575 = vmul.f32 %v1573, %v78
    %v1576 = vadd.f32 %v1574, 1e-12
    %v1577 = vadd.f32 %v1575, 1e-12
    %v1578 = vrsqrt.pop %v1576
    %v1579 = vrsqrt.pop %v1577
    %v1580 = vmul.f32 %v1564, %v1578
    %v1581 = vmul.f32 %v1565, %v1579
    %v1582 = vlaneseq
    %v1583 = vshrl.u32 %v1582, 7
    %v1584 = vsub.s32 0, %v1583
    %v1585 = vrot.slane %v1001, %v1584
    %v1586 = vmul.f32 %v1580, %v1585
    %v1587 = vmul.f32 %v1581, %v1585
    %v1588 = vlaneseq
    %v1589 = vshrl.u32 %v1588, 7
    %v1590 = vsub.s32 0, %v1589
    %v1591 = vrot.slane %v1002, %v1590
    %v1592 = vadd.f32 %v1586, %v1591
    %v1593 = vadd.f32 %v1587, %v1591
    %v1594 = vpack.c.bf16 %v1593, %v1592
    %v1595 = vlaneseq
    %v1596 = vshrl.u32 %v1595, 7
    %v1597 = vsub.s32 0, %v1596
    %v1598 = vrot.slane %v999, %v1597
    %v1603 = vunpack.c.l.b16 %v1017
    %v1604 = vunpack.c.l.b16 %v1018
    %v1605 = vunpack.c.l.b16 %v1019
    %v1606 = vunpack.c.l.b16 %v1020
    %v1607 = vpack.c.b16 %v1604, %v1603
    %v1608 = vpack.c.b16 %v1606, %v1605
    %v1612 = vsel %vm71, %v1594, 0
    %1614 = vmatprep.subr.bf16.mxu0 0
    %1615 = vmatpush1.bf16.msra.mxu0 0
    %1616 = vmatprep.subr.bf16.mxu0 0
    %1617 = vmatpush1.bf16.msra.mxu0 0
    %1618 = vmatprep.subr.bf16.mxu0 0
    %1619 = vmatpush1.bf16.msra.mxu0 0
    %1620 = vmatprep.subr.bf16.mxu0 0
    %1621 = vmatpush1.bf16.msra.mxu0 0
    %1622 = vmatprep.subr.bf16.mxu0 0
    %1623 = vmatpush1.bf16.msra.mxu0 0
    %1624 = vmatprep.subr.bf16.mxu0 0
    %1625 = vmatpush1.bf16.msra.mxu0 0
    %1626 = vmatprep.subr.bf16.mxu0 0
    %1627 = vmatpush1.bf16.msra.mxu0 %v1608
    %1628 = vmatprep.subr.bf16.mxu0 0
    %1629 = vmatpush1.bf16.msra.mxu0 %v1607
    %1630 = vmatprep.subr.bf16.mxu0 0
    %1631 = vmatpush2.bf16.msra.mxu0 0
    %1632 = vmatprep.subr.bf16.mxu0 0
    %1633 = vmatpush2.bf16.msra.mxu0 0
    %1634 = vmatprep.subr.bf16.mxu0 0
    %1635 = vmatpush2.bf16.msra.mxu0 0
    %1636 = vmatprep.subr.bf16.mxu0 0
    %1637 = vmatpush2.bf16.msra.mxu0 0
    %1638 = vmatprep.subr.bf16.mxu0 0
    %1639 = vmatpush2.bf16.msra.mxu0 0
    %1640 = vmatprep.subr.bf16.mxu0 0
    %1641 = vmatpush2.bf16.msra.mxu0 0
    %1642 = vmatprep.subr.bf16.mxu0 0
    %1643 = vmatpush2.bf16.msra.mxu0 0
    %1644 = vmatprep.subr.bf16.mxu0 0
    %1645 = vmatpush2.bf16.msra.mxu0 0
    %1646 = vmatprep.mubr.bf16.mxu0 0
    %1647 = vmatmul.mubr.bf16.gmra.mxu0 %v1612
    %v1648 = vpop.f32.mrf.mxu0
    %v1649 = vadd.f32 %v1598, %v1648
    %v1650 = vpop.f32.mrf.mxu0
    %v1651 = vpop.f32.mrf.mxu0
    %v1652 = vadd.f32 %v1598, %v1651
    %v1653 = vpop.f32.mrf.mxu0
    %1654 = vdwg.mxu0
    %v1655 = vmul.f32 %v1649, 0.5
    %v1656 = vmul.f32 %v1652, 0.5
    %v1657 = vmul.f32 %v1649, 0.70710677
    %v1658 = vmul.f32 %v1652, 0.70710677
    %v1659 = verf.f32.pop %v1657
    %v1660 = verf.f32.pop %v1658
    %v1661 = vadd.f32 %v1659, 1.0
    %v1662 = vadd.f32 %v1660, 1.0
    %v1663 = vmul.f32 %v1655, %v1661
    %v1664 = vmul.f32 %v1656, %v1662
    %v1665 = vpack.c.bf16 %v1664, %v1663
    %v1666 = vlaneseq
    %v1667 = vshrl.u32 %v1666, 7
    %v1668 = vsub.s32 0, %v1667
    %v1669 = vrot.slane %v1003, %v1668
    %v1686 = vunpack.c.l.b16 %v1022
    %v1687 = vunpack.c.l.b16 %v1023
    %v1688 = vunpack.c.l.b16 %v1024
    %v1689 = vunpack.c.l.b16 %v1025
    %v1690 = vunpack.c.l.b16 %v1026
    %v1691 = vunpack.c.l.b16 %v1027
    %v1692 = vunpack.c.l.b16 %v1028
    %v1693 = vunpack.c.l.b16 %v1029
    %v1694 = vunpack.c.l.b16 %v1030
    %v1695 = vunpack.c.l.b16 %v1031
    %v1696 = vunpack.c.l.b16 %v1032
    %v1697 = vunpack.c.l.b16 %v1033
    %v1698 = vunpack.c.l.b16 %v1034
    %v1699 = vunpack.c.l.b16 %v1035
    %v1700 = vunpack.c.l.b16 %v1036
    %v1701 = vunpack.c.l.b16 %v1037
    %v1702 = vpack.c.b16 %v1687, %v1686
    %v1703 = vpack.c.b16 %v1689, %v1688
    %v1704 = vpack.c.b16 %v1691, %v1690
    %v1705 = vpack.c.b16 %v1693, %v1692
    %v1706 = vpack.c.b16 %v1695, %v1694
    %v1707 = vpack.c.b16 %v1697, %v1696
    %v1708 = vpack.c.b16 %v1699, %v1698
    %v1709 = vpack.c.b16 %v1701, %v1700
    %1718 = vmatprep.subr.bf16.mxu0 0
    %1719 = vmatpush1.bf16.msra.mxu0 %v1709
    %1720 = vmatprep.subr.bf16.mxu0 0
    %1721 = vmatpush1.bf16.msra.mxu0 %v1708
    %1722 = vmatprep.subr.bf16.mxu0 0
    %1723 = vmatpush1.bf16.msra.mxu0 %v1707
    %1724 = vmatprep.subr.bf16.mxu0 0
    %1725 = vmatpush1.bf16.msra.mxu0 %v1706
    %1726 = vmatprep.subr.bf16.mxu0 0
    %1727 = vmatpush1.bf16.msra.mxu0 %v1705
    %1728 = vmatprep.subr.bf16.mxu0 0
    %1729 = vmatpush1.bf16.msra.mxu0 %v1704
    %1730 = vmatprep.subr.bf16.mxu0 0
    %1731 = vmatpush1.bf16.msra.mxu0 %v1703
    %1732 = vmatprep.subr.bf16.mxu0 0
    %1733 = vmatpush1.bf16.msra.mxu0 %v1702
    %1734 = vmatprep.subr.bf16.mxu0 0
    %1735 = vmatpush2.bf16.msra.mxu0 0
    %1736 = vmatprep.subr.bf16.mxu0 0
    %1737 = vmatpush2.bf16.msra.mxu0 0
    %1738 = vmatprep.subr.bf16.mxu0 0
    %1739 = vmatpush2.bf16.msra.mxu0 0
    %1740 = vmatprep.subr.bf16.mxu0 0
    %1741 = vmatpush2.bf16.msra.mxu0 0
    %1742 = vmatprep.subr.bf16.mxu0 0
    %1743 = vmatpush2.bf16.msra.mxu0 0
    %1744 = vmatprep.subr.bf16.mxu0 0
    %1745 = vmatpush2.bf16.msra.mxu0 0
    %1746 = vmatprep.subr.bf16.mxu0 0
    %1747 = vmatpush2.bf16.msra.mxu0 0
    %1748 = vmatprep.subr.bf16.mxu0 0
    %1749 = vmatpush2.bf16.msra.mxu0 0
    %1750 = vmatprep.mubr.bf16.mxu0 0
    %1751 = vmatmul.mubr.bf16.gmra.mxu0 %v1665
    %v1752 = vpop.f32.mrf.mxu0
    %v1753 = vadd.f32 %v1669, %v1752
    %v1754 = vpop.f32.mrf.mxu0
    %v1755 = vpop.f32.mrf.mxu0
    %v1756 = vadd.f32 %v1669, %v1755
    %v1757 = vpop.f32.mrf.mxu0
    %1758 = vdwg.mxu0
    %v1759 = vadd.f32 %v1753, %v1592
    %v1760 = vadd.f32 %v1756, %v1593
    %v1761 = vsel %vm71, %v1759, 0.0
    %1762 = vadd.xlane.f32.xlu0 %v1761
    %v1763 = vpop.xlane.xlu0 %1762
    %v1764 = vsel %vm71, %v1760, 0.0
    %1765 = vadd.xlane.f32.xlu0 %v1764
    %v1766 = vpop.xlane.xlu0 %1765
    %v1767 = vmul.f32 %v1763, %v78
    %v1768 = vmul.f32 %v1766, %v78
    %v1769 = vsub.f32 %v1759, %v1767
    %v1770 = vsub.f32 %v1760, %v1768
    %v1771 = vmul.f32 %v1769, %v1769
    %v1772 = vmul.f32 %v1770, %v1770
    %v1773 = vsel %vm71, %v1771, 0.0
    %1774 = vadd.xlane.f32.xlu0 %v1773
    %v1775 = vpop.xlane.xlu0 %1774
    %v1776 = vsel %vm71, %v1772, 0.0
    %1777 = vadd.xlane.f32.xlu0 %v1776
    %v1778 = vpop.xlane.xlu0 %1777
    %v1779 = vmul.f32 %v1775, %v78
    %v1780 = vmul.f32 %v1778, %v78
    %v1781 = vadd.f32 %v1779, 1e-12
    %v1782 = vadd.f32 %v1780, 1e-12
    %v1783 = vrsqrt.pop %v1781
    %v1784 = vrsqrt.pop %v1782
    %v1785 = vmul.f32 %v1769, %v1783
    %v1786 = vmul.f32 %v1770, %v1784
    %v1787 = vlaneseq
    %v1788 = vshrl.u32 %v1787, 7
    %v1789 = vsub.s32 0, %v1788
    %v1790 = vrot.slane %v1004, %v1789
    %v1791 = vmul.f32 %v1785, %v1790
    %v1792 = vmul.f32 %v1786, %v1790
    %v1793 = vlaneseq
    %v1794 = vshrl.u32 %v1793, 7
    %v1795 = vsub.s32 0, %v1794
    %v1796 = vrot.slane %v1005, %v1795
    %v1797 = vadd.f32 %v1791, %v1796
    %v1798 = vadd.f32 %v1792, %v1796
    %v1799 = vld [vmem:[%s4] sm:$0x1]
    %v1800 = vpack.c.bf16 %v1798, %v1797
    %v1802 = vsel %vm229, %v1799, 0
    %1804 = vmatprep.subr.bf16.mxu0 0
    %1805 = vmatpush1.bf16.msra.mxu0 0
    %1806 = vmatprep.subr.bf16.mxu0 0
    %1807 = vmatpush1.bf16.msra.mxu0 0
    %1808 = vmatprep.subr.bf16.mxu0 0
    %1809 = vmatpush1.bf16.msra.mxu0 0
    %1810 = vmatprep.subr.bf16.mxu0 0
    %1811 = vmatpush1.bf16.msra.mxu0 0
    %1812 = vmatprep.subr.bf16.mxu0 0
    %1813 = vmatpush1.bf16.msra.mxu0 0
    %1814 = vmatprep.subr.bf16.mxu0 0
    %1815 = vmatpush1.bf16.msra.mxu0 0
    %1816 = vmatprep.subr.bf16.mxu0 0
    %1817 = vmatpush1.bf16.msra.mxu0 0
    %1818 = vmatprep.subr.bf16.mxu0 0
    %1819 = vmatpush1.bf16.msra.mxu0 %v1800
    %1820 = vmatprep.subr.bf16.mxu0 0
    %1821 = vmatpush2.bf16.msra.mxu0 0
    %1822 = vmatprep.subr.bf16.mxu0 0
    %1823 = vmatpush2.bf16.msra.mxu0 0
    %1824 = vmatprep.subr.bf16.mxu0 0
    %1825 = vmatpush2.bf16.msra.mxu0 0
    %1826 = vmatprep.subr.bf16.mxu0 0
    %1827 = vmatpush2.bf16.msra.mxu0 0
    %1828 = vmatprep.subr.bf16.mxu0 0
    %1829 = vmatpush2.bf16.msra.mxu0 0
    %1830 = vmatprep.subr.bf16.mxu0 0
    %1831 = vmatpush2.bf16.msra.mxu0 0
    %1832 = vmatprep.subr.bf16.mxu0 0
    %1833 = vmatpush2.bf16.msra.mxu0 0
    %1834 = vmatprep.subr.bf16.mxu0 0
    %1835 = vmatpush2.bf16.msra.mxu0 0
    %1836 = vmatprep.mubr.bf16.mxu0 0
    %1837 = vmatmul.mubr.bf16.gmra.mxu0 %v1802
    %v1838 = vpop.f32.mrf.mxu0
    %v1839 = vadd.f32 0.0, %v1838
    %v1840 = vpop.f32.mrf.mxu0
    %v1841 = vpop.f32.mrf.mxu0
    %v1842 = vpop.f32.mrf.mxu0
    %1843 = vdwg.mxu0
    %v1844 = vpack.c.bf16 %v1839, %v1839
    %v1845 = vld [vmem:[%s9] sm:$0xf]
    %v1846 = vld [vmem:[%s9 + $0x4] sm:$0xf]
    %v1847 = vld [vmem:[%s9 + $0x8] sm:$0xf]
    %v1848 = vld [vmem:[%s9 + $0xc] sm:$0xf]
    %v1849 = vld [vmem:[%s11 + $0x4] sm:$0x1]
    %v1850 = vlaneseq
    %v1851 = vshrl.u32 %v1850, 7
    %v1852 = vsub.s32 0, %v1851
    %v1853 = vrot.slane %v1849, %v1852
    %v1858 = vunpack.c.l.b16 %v1845
    %v1859 = vunpack.c.l.b16 %v1846
    %v1860 = vunpack.c.l.b16 %v1847
    %v1861 = vunpack.c.l.b16 %v1848
    %v1862 = vpack.c.b16 %v1859, %v1858
    %v1863 = vpack.c.b16 %v1861, %v1860
    %v1867 = vsel %vm71, %v1844, 0
    %1869 = vmatprep.subr.bf16.mxu0 0
    %1870 = vmatpush1.bf16.msra.mxu0 0
    %1871 = vmatprep.subr.bf16.mxu0 0
    %1872 = vmatpush1.bf16.msra.mxu0 0
    %1873 = vmatprep.subr.bf16.mxu0 0
    %1874 = vmatpush1.bf16.msra.mxu0 0
    %1875 = vmatprep.subr.bf16.mxu0 0
    %1876 = vmatpush1.bf16.msra.mxu0 0
    %1877 = vmatprep.subr.bf16.mxu0 0
    %1878 = vmatpush1.bf16.msra.mxu0 0
    %1879 = vmatprep.subr.bf16.mxu0 0
    %1880 = vmatpush1.bf16.msra.mxu0 0
    %1881 = vmatprep.subr.bf16.mxu0 0
    %1882 = vmatpush1.bf16.msra.mxu0 %v1863
    %1883 = vmatprep.subr.bf16.mxu0 0
    %1884 = vmatpush1.bf16.msra.mxu0 %v1862
    %1885 = vmatprep.subr.bf16.mxu0 0
    %1886 = vmatpush2.bf16.msra.mxu0 0
    %1887 = vmatprep.subr.bf16.mxu0 0
    %1888 = vmatpush2.bf16.msra.mxu0 0
    %1889 = vmatprep.subr.bf16.mxu0 0
    %1890 = vmatpush2.bf16.msra.mxu0 0
    %1891 = vmatprep.subr.bf16.mxu0 0
    %1892 = vmatpush2.bf16.msra.mxu0 0
    %1893 = vmatprep.subr.bf16.mxu0 0
    %1894 = vmatpush2.bf16.msra.mxu0 0
    %1895 = vmatprep.subr.bf16.mxu0 0
    %1896 = vmatpush2.bf16.msra.mxu0 0
    %1897 = vmatprep.subr.bf16.mxu0 0
    %1898 = vmatpush2.bf16.msra.mxu0 0
    %1899 = vmatprep.subr.bf16.mxu0 0
    %1900 = vmatpush2.bf16.msra.mxu0 0
    %1901 = vmatprep.mubr.bf16.mxu0 0
    %1902 = vmatmul.mubr.bf16.gmra.mxu0 %v1867
    %v1903 = vpop.f32.mrf.mxu0
    %v1904 = vadd.f32 %v1853, %v1903
    %v1905 = vpop.f32.mrf.mxu0
    %v1906 = vpop.f32.mrf.mxu0
    %v1907 = vpop.f32.mrf.mxu0
    %1908 = vdwg.mxu0
    %1909 = vst [vmem:[#allocation2] sm:$0x3] %v1904
    // Predicated region
    $region50: #{tpu_custom_call.1} parent=1 // pred_check
      _
    $region51: #{tpu_custom_call.1} parent=1 // pred_check_branch
      %1911 = sbr.rel (0) target = $region53
    $region52: #{tpu_custom_call.1} parent=1 // pred_region
      %s1913 = ssub.s32 32, 32
      %1914 = vsyncadd [#allocation3], %s1913
      %s1916 = sshll.u32 [#allocation2], 4
      %s1917 = int_to_ptr.vmem [resolvable:$true] %s1916
      %1919 = dma.vmem_to_hbm [thread:$0]  %s1917, 32, %s12, [#allocation3]
    $region53: #{tpu_custom_call.1} parent=1 // pred_fallthru
      _
    // Predicated region
    $region54: #{tpu_custom_call.1} parent=1 // pred_check
      _
    $region55: #{tpu_custom_call.1} parent=1 // pred_check_branch
      %1921 = sbr.rel (0) target = $region57
    $region56: #{tpu_custom_call.1} parent=1 // pred_region
      %1922 = dma.done [#allocation3], 32
    $region57: #{tpu_custom_call.1} parent=1 // pred_fallthru
      _
    %1923 = vsyncpa [#allocation3], 1

</llo_original>
